<compile_context>
chip_gen: v5e
topology: v5e:2x2
jax: 0.10.0
libtpu: 0.0.40
codegen_flags: <defaults>
</compile_context>

<pallas_src>
import jax
import jax.numpy as jnp
from jax import lax
from jax.experimental import pallas as pl
from jax.experimental.pallas import tpu as pltpu


def _refine_kernel(x_ref, w1_ref, b1_ref, w2_ref, b2_ref, w3_ref, b3_ref,
                   o_ref, h1_pad):
    # x_ref  : (1, H+2, W, K1) bf16  im2col'ed conv1 input with zero rows at
    #                                 0 and H+1 (K1 = 9*Cin, unpadded)
    # w1_ref : (K1, 128)       bf16
    # b1_ref : (1, 128)        f32
    # w2_ref : (9, 128, 128)   bf16  conv2 taps, index = 3*dy + dx
    # b2_ref : (1, 128)        f32
    # w3_ref : (128, 128)      bf16  conv3 weight, Cout padded 68->128
    # b3_ref : (1, 128)        f32
    # o_ref  : (1, TR, W, 128) f32   row-block output (wrapper slices :68)
    # h1_pad : VMEM (TR+2, W+16, 128) bf16 scratch; activation lives at
    #          columns 8..W+7 (tile-aligned), zero halo tiles on both sides.
    TR = o_ref.shape[1]
    W = o_ref.shape[2]
    C1 = w1_ref.shape[1]
    K1 = w1_ref.shape[0]
    Wp = h1_pad.shape[1]                     # = W + 16
    r = pl.program_id(1)
    nR = pl.num_programs(1)

    # ---- conv1: one im2col matmul over TR+2 rows (block + 1 halo row each
    # side; halo rows are recomputed here, image-boundary halos zeroed below).
    xs = x_ref[0, pl.ds(r * TR, TR + 2), :, :].reshape((TR + 2) * W, K1)
    h1 = jnp.maximum(
        jnp.dot(xs, w1_ref[...], preferred_element_type=jnp.float32)
        + b1_ref[...], 0.0).astype(h1_pad.dtype)
    h1_pad[0:TR + 2, 8:8 + W, :] = h1.reshape(TR + 2, W, C1)     # aligned store

    # Zero the left/right halo column tiles (col 7 and col W+8 act as conv2's
    # zero padding; the rest of these tiles is never read).
    zc = jnp.zeros((TR + 2, 8, C1), h1_pad.dtype)
    h1_pad[0:TR + 2, 0:8, :] = zc
    h1_pad[0:TR + 2, W + 8:W + 16, :] = zc

    # At the image top/bottom the halo row is conv2's zero padding, not conv1
    # output (the x_ref zero rows would otherwise leave relu(b1) there).
    @pl.when(r == 0)
    def _():
        h1_pad[0:1, :, :] = jnp.zeros((1, Wp, C1), h1_pad.dtype)

    @pl.when(r == nR - 1)
    def _():
        h1_pad[TR + 1:TR + 2, :, :] = jnp.zeros((1, Wp, C1), h1_pad.dtype)

    # ---- conv2: 9 direct K=128 dots into one f32 accumulator.
    # One scratch read per dx (dy shifts are free slices of the value on the
    # untiled leading axis).  dx=1 read is tile-aligned; dx=0/2 are sublane
    # shifts of +/-1.
    acc2 = None
    for dx in range(3):
        slab = h1_pad[0:TR + 2, 7 + dx:7 + dx + W, :]            # (TR+2, W, C1)
        for dy in range(3):
            part = slab[dy:dy + TR].reshape(TR * W, C1)
            d = jnp.dot(part, w2_ref[3 * dy + dx],
                        preferred_element_type=jnp.float32)
            acc2 = d if acc2 is None else acc2 + d
    h2 = jnp.maximum(acc2 + b2_ref[...], 0.0).astype(jnp.bfloat16)

    # ---- conv3 (1x1), Cout padded to 128 -> unmasked lane-dense store.
    out = jnp.dot(h2, w3_ref[...],
                  preferred_element_type=jnp.float32) + b3_ref[...]
    o_ref[0] = out.reshape(TR, W, w3_ref.shape[1]).astype(o_ref.dtype)


def _pick_row_block(H):
    """Rows per grid step: 8..32, preferring >=2 row blocks for pipelining."""
    for t in (32, 16, 8):
        if H % t == 0 and H // t >= 2:
            return t
    for t in (32, 16, 8):
        if H % t == 0:
            return t
    return H


def heatmap_refine_block(x_nchw, params, nchw_output=True):
    """Forward pass matching the PyTorch module.

    x_nchw: (B, Cin, H, W) f32.  Returns (B, 68, H, W) f32 (NCHW, like
    PyTorch) by default; pass nchw_output=False to get (B, H, W, 68) NHWC and
    skip the extra full-tensor transpose pass.
    """
    w1, b1, w2, b2, w3, b3 = params
    B, Cin, H, W = x_nchw.shape
    C1 = w1.shape[2]                       # 128
    Cout = w3.shape[1]                     # 68
    C3P = ((Cout + 127) // 128) * 128      # 128: lane-dense output store
    K1 = 9 * Cin                           # conv1 im2col contraction (unpadded)
    TR = _pick_row_block(H)
    nR = H // TR

    # --- wrapper-side layout glue: NCHW -> NHWC, conv1 im2col ---------------
    x = jnp.transpose(x_nchw, (0, 2, 3, 1)).astype(jnp.bfloat16)
    x_pad = jnp.pad(x, ((0, 0), (1, 1), (1, 1), (0, 0)))
    cols = [x_pad[:, dy:dy + H, dx:dx + W, :]
            for dy in range(3) for dx in range(3)]
    x_col = jnp.concatenate(cols, axis=-1)                 # (B, H, W, 9*Cin)
    # One zero row top/bottom so every row block reads a static (TR+2)-row
    # window; the resulting relu(b1) halo rows are zeroed in-kernel.
    x_colp = jnp.pad(x_col, ((0, 0), (1, 1), (0, 0), (0, 0)))  # (B, H+2, W, K1)

    # --- weights: bf16 matmul operands, f32 biases --------------------------
    w1f = w1.reshape(K1, C1).astype(jnp.bfloat16)                    # (K1,128)
    w2f = w2.astype(jnp.bfloat16)                                    # (9,128,128)
    w3p = jnp.pad(w3, ((0, 0), (0, C3P - Cout))).astype(jnp.bfloat16)  # (128,128)
    b3p = jnp.pad(b3, ((0, 0), (0, C3P - Cout))).astype(jnp.float32)   # (1,128)
    b1f = b1.astype(jnp.float32)
    b2f = b2.astype(jnp.float32)

    out_nhwc = pl.pallas_call(
        _refine_kernel,
        out_shape=jax.ShapeDtypeStruct((B, H, W, C3P), jnp.float32),
        grid_spec=pltpu.PrefetchScalarGridSpec(
            num_scalar_prefetch=0,
            grid=(B, nR),
            in_specs=[
                # full per-batch input, resident across the row-block axis
                pl.BlockSpec((1, H + 2, W, K1), lambda b, r: (b, 0, 0, 0)),
                pl.BlockSpec((K1, C1), lambda b, r: (0, 0)),
                pl.BlockSpec((1, C1), lambda b, r: (0, 0)),
                pl.BlockSpec((9, C1, C1), lambda b, r: (0, 0, 0)),
                pl.BlockSpec((1, C1), lambda b, r: (0, 0)),
                pl.BlockSpec((C1, C3P), lambda b, r: (0, 0)),
                pl.BlockSpec((1, C3P), lambda b, r: (0, 0)),
            ],
            out_specs=pl.BlockSpec((1, TR, W, C3P), lambda b, r: (b, r, 0, 0)),
            scratch_shapes=[pltpu.VMEM((TR + 2, W + 16, C1), jnp.bfloat16)],
        ),
        compiler_params=pltpu.CompilerParams(
            dimension_semantics=("parallel", "arbitrary"),
            vmem_limit_bytes=32 * 1024 * 1024),
    )(x_colp, w1f, b1f, w2f, b2f, w3p, b3p)

    out_nhwc = out_nhwc[..., :Cout]
    if not nchw_output:
        return out_nhwc
    # PyTorch's NCHW output convention (extra full-tensor transpose pass).
    return jnp.transpose(out_nhwc, (0, 3, 1, 2))


def _init_params(key, in_channels):
    """Deterministic synthetic parameters.

    PyTorch shapes: conv1.w (128,Cin,3,3), conv2.w (128,128,3,3),
    conv3.w (68,128,1,1).  We store 3x3 weights as (9, Cin, Cout) (HWIO
    flattened over taps, index = 3*dy+dx) and biases as (1, C).
    """
    k = jax.random.split(key, 6)
    w1 = jax.random.normal(k[0], (9, in_channels, 128), jnp.float32) * 0.05
    b1 = jax.random.normal(k[1], (1, 128), jnp.float32) * 0.05
    w2 = jax.random.normal(k[2], (9, 128, 128), jnp.float32) * 0.05
    b2 = jax.random.normal(k[3], (1, 128), jnp.float32) * 0.05
    w3 = jax.random.normal(k[4], (128, 68), jnp.float32) * 0.05
    b3 = jax.random.normal(k[5], (1, 68), jnp.float32) * 0.05
    return (w1, b1, w2, b2, w3, b3)


def _reference(x_nchw, params, bf16_operands=True):
    """Plain-JAX reference (NHWC convs).

    With bf16_operands=True it mirrors the kernel's numerics (bf16 matmul
    operands, f32 accumulation, f32 bias/ReLU); with False it is the pure-f32
    math of the PyTorch module.
    """
    w1, b1, w2, b2, w3, b3 = params
    Cin = x_nchw.shape[1]
    x = jnp.transpose(x_nchw, (0, 2, 3, 1)).astype(jnp.float32)
    dn = ("NHWC", "HWIO", "NHWC")
    opd = jnp.bfloat16 if bf16_operands else jnp.float32

    def conv(h, w_hwio, b, pad):
        y = lax.conv_general_dilated(
            h.astype(opd), w_hwio.astype(opd), (1, 1),
            [(pad, pad), (pad, pad)], dimension_numbers=dn,
            preferred_element_type=jnp.float32)
        return y + b.reshape(1, 1, 1, -1).astype(jnp.float32)

    h = jax.nn.relu(conv(x, w1.reshape(3, 3, Cin, 128), b1, 1))
    h = jax.nn.relu(conv(h, w2.reshape(3, 3, 128, 128), b2, 1))
    y = conv(h, w3.reshape(1, 1, 128, 68), b3, 0)
    return jnp.transpose(y, (0, 3, 1, 2))


if __name__ == "__main__":
    key = jax.random.PRNGKey(0)
    B, Cin, H, W = 2, 4, 16, 16
    kx, kp = jax.random.split(key)
    x = jax.random.normal(kx, (B, Cin, H, W), jnp.float32)
    params = _init_params(kp, Cin)

    out = jax.block_until_ready(heatmap_refine_block(x, params))
    assert out.shape == (B, 68, H, W), out.shape

    # Tight check against a reference with the same bf16-operand / f32-acc
    # quantization as the kernel's MXU matmuls.
    ref_bf16 = jax.block_until_ready(_reference(x, params, bf16_operands=True))
    assert jnp.allclose(out, ref_bf16, rtol=1e-3, atol=1e-3), (
        float(jnp.max(jnp.abs(out - ref_bf16))))

    # Looser sanity check against the pure-f32 math of the original module.
    ref_f32 = jax.block_until_ready(_reference(x, params, bf16_operands=False))
    assert jnp.allclose(out, ref_f32, rtol=2e-2, atol=2e-2), (
        float(jnp.max(jnp.abs(out - ref_f32))))

    print("KERNEL_OK")
</pallas_src>

<mosaic_0001>
module attributes {stable_mosaic.version = 11 : i64} {
  func.func @_refine_kernel(%arg0: i32, %arg1: i32, %arg2: memref<1x18x16x36xbf16, #tpu.memory_space<vmem>>, %arg3: memref<36x128xbf16, #tpu.memory_space<vmem>>, %arg4: memref<1x128xf32, #tpu.memory_space<vmem>>, %arg5: memref<9x128x128xbf16, #tpu.memory_space<vmem>>, %arg6: memref<1x128xf32, #tpu.memory_space<vmem>>, %arg7: memref<128x128xbf16, #tpu.memory_space<vmem>>, %arg8: memref<1x128xf32, #tpu.memory_space<vmem>>, %arg9: memref<1x8x16x128xf32, #tpu.memory_space<vmem>>, %arg10: memref<10x32x128xbf16, #tpu.memory_space<vmem>>) attributes {dimension_semantics = [#tpu.dimension_semantics<parallel>, #tpu.dimension_semantics<arbitrary>], iteration_bounds = array<i64: 2, 2>, scalar_prefetch = 0 : i64, scratch_operands = 1 : i64, tpu.core_type = #tpu.core_type<tc>, window_params = [{transform_indices = @transform_0, window_bounds = array<i64: 1, 18, 16, 36>}, {pipeline_mode = #tpu.pipeline_mode<synchronous>, transform_indices = @transform_1, window_bounds = array<i64: 36, 128>}, {pipeline_mode = #tpu.pipeline_mode<synchronous>, transform_indices = @transform_2, window_bounds = array<i64: 1, 128>}, {pipeline_mode = #tpu.pipeline_mode<synchronous>, transform_indices = @transform_3, window_bounds = array<i64: 9, 128, 128>}, {pipeline_mode = #tpu.pipeline_mode<synchronous>, transform_indices = @transform_4, window_bounds = array<i64: 1, 128>}, {pipeline_mode = #tpu.pipeline_mode<synchronous>, transform_indices = @transform_5, window_bounds = array<i64: 128, 128>}, {pipeline_mode = #tpu.pipeline_mode<synchronous>, transform_indices = @transform_6, window_bounds = array<i64: 1, 128>}, {transform_indices = @transform_7, window_bounds = array<i64: 1, 8, 16, 128>}]} {
    %c8_i32 = arith.constant 8 : i32
    %0 = arith.muli %arg1, %c8_i32 : i32
    %c0 = arith.constant 0 : index
    %1 = arith.index_cast %0 : i32 to index
    %c0_0 = arith.constant 0 : index
    %c0_1 = arith.constant 0 : index
    %2 = vector.load %arg2[%c0, %1, %c0_0, %c0_1] : memref<1x18x16x36xbf16, #tpu.memory_space<vmem>>, vector<1x10x16x36xbf16>
    %3 = vector.shape_cast %2 : vector<1x10x16x36xbf16> to vector<10x16x36xbf16>
    %4 = vector.shape_cast %3 : vector<10x16x36xbf16> to vector<160x36xbf16>
    %c0_2 = arith.constant 0 : index
    %c0_3 = arith.constant 0 : index
    %5 = vector.load %arg3[%c0_2, %c0_3] : memref<36x128xbf16, #tpu.memory_space<vmem>>, vector<36x128xbf16>
    %cst = arith.constant dense<0.000000e+00> : vector<160x128xf32>
    %6 = tpu.matmul %4, %5, %cst {dimension_numbers = #tpu.dot_dimension_numbers<[1], [0], [0], [1], [0, 0, 1, 1], [], []>} : vector<160x36xbf16>, vector<36x128xbf16>, vector<160x128xf32> -> vector<160x128xf32>
    %c0_4 = arith.constant 0 : index
    %c0_5 = arith.constant 0 : index
    %7 = vector.load %arg4[%c0_4, %c0_5] : memref<1x128xf32, #tpu.memory_space<vmem>>, vector<1x128xf32>
    %8 = vector.broadcast %7 : vector<1x128xf32> to vector<160x128xf32>
    %9 = arith.addf %6, %8 : vector<160x128xf32>
    %cst_6 = arith.constant 0.000000e+00 : f32
    %10 = vector.broadcast %cst_6 : f32 to vector<160x128xf32>
    %11 = arith.maximumf %9, %10 : vector<160x128xf32>
    %12 = arith.truncf %11 : vector<160x128xf32> to vector<160x128xbf16>
    %13 = vector.shape_cast %12 : vector<160x128xbf16> to vector<10x16x128xbf16>
    %c0_7 = arith.constant 0 : index
    %c8 = arith.constant 8 : index
    %c0_8 = arith.constant 0 : index
    %14 = vector.load %arg10[%c0_7, %c8, %c0_8] : memref<10x32x128xbf16, #tpu.memory_space<vmem>>, vector<10x16x128xbf16>
    tpu.vector_store %arg10[%c0_7, %c8, %c0_8], %13 {strides = array<i32>} : memref<10x32x128xbf16, #tpu.memory_space<vmem>>, vector<10x16x128xbf16>,
    %cst_9 = arith.constant 0.000000e+00 : bf16
    %15 = vector.broadcast %cst_9 : bf16 to vector<10x8x128xbf16>
    %c0_10 = arith.constant 0 : index
    %c0_11 = arith.constant 0 : index
    %c0_12 = arith.constant 0 : index
    %16 = vector.load %arg10[%c0_10, %c0_11, %c0_12] : memref<10x32x128xbf16, #tpu.memory_space<vmem>>, vector<10x8x128xbf16>
    tpu.vector_store %arg10[%c0_10, %c0_11, %c0_12], %15 {strides = array<i32>} : memref<10x32x128xbf16, #tpu.memory_space<vmem>>, vector<10x8x128xbf16>,
    %c0_13 = arith.constant 0 : index
    %c24 = arith.constant 24 : index
    %c0_14 = arith.constant 0 : index
    %17 = vector.load %arg10[%c0_13, %c24, %c0_14] : memref<10x32x128xbf16, #tpu.memory_space<vmem>>, vector<10x8x128xbf16>
    tpu.vector_store %arg10[%c0_13, %c24, %c0_14], %15 {strides = array<i32>} : memref<10x32x128xbf16, #tpu.memory_space<vmem>>, vector<10x8x128xbf16>,
    %c0_i32 = arith.constant 0 : i32
    %18 = arith.cmpi eq, %arg1, %c0_i32 : i32
    %19 = arith.extui %18 : i1 to i32
    %c0_i32_15 = arith.constant 0 : i32
    %20 = arith.cmpi ne, %19, %c0_i32_15 : i32
    scf.if %20 {
      %cst_66 = arith.constant 0.000000e+00 : bf16
      %95 = vector.broadcast %cst_66 : bf16 to vector<1x32x128xbf16>
      %c0_67 = arith.constant 0 : index
      %c0_68 = arith.constant 0 : index
      %c0_69 = arith.constant 0 : index
      %96 = vector.load %arg10[%c0_67, %c0_68, %c0_69] : memref<10x32x128xbf16, #tpu.memory_space<vmem>>, vector<1x32x128xbf16>
      tpu.vector_store %arg10[%c0_67, %c0_68, %c0_69], %95 {strides = array<i32>} : memref<10x32x128xbf16, #tpu.memory_space<vmem>>, vector<1x32x128xbf16>,
    } else {
    }
    %c1_i32 = arith.constant 1 : i32
    %21 = arith.cmpi eq, %arg1, %c1_i32 : i32
    %22 = arith.extui %21 : i1 to i32
    %c0_i32_16 = arith.constant 0 : i32
    %23 = arith.cmpi ne, %22, %c0_i32_16 : i32
    scf.if %23 {
      %cst_66 = arith.constant 0.000000e+00 : bf16
      %95 = vector.broadcast %cst_66 : bf16 to vector<1x32x128xbf16>
      %c9_67 = arith.constant 9 : index
      %c0_68 = arith.constant 0 : index
      %c0_69 = arith.constant 0 : index
      %96 = vector.load %arg10[%c9_67, %c0_68, %c0_69] : memref<10x32x128xbf16, #tpu.memory_space<vmem>>, vector<1x32x128xbf16>
      tpu.vector_store %arg10[%c9_67, %c0_68, %c0_69], %95 {strides = array<i32>} : memref<10x32x128xbf16, #tpu.memory_space<vmem>>, vector<1x32x128xbf16>,
    } else {
    }
    %c0_17 = arith.constant 0 : index
    %c7 = arith.constant 7 : index
    %c0_18 = arith.constant 0 : index
    %24 = vector.load %arg10[%c0_17, %c7, %c0_18] : memref<10x32x128xbf16, #tpu.memory_space<vmem>>, vector<10x16x128xbf16>
    %25 = vector.extract_strided_slice %24 {offsets = [0, 0, 0], sizes = [8, 16, 128], strides = [1, 1, 1]} : vector<10x16x128xbf16> to vector<8x16x128xbf16>
    %26 = vector.shape_cast %25 : vector<8x16x128xbf16> to vector<128x128xbf16>
    %c0_19 = arith.constant 0 : index
    %c0_20 = arith.constant 0 : index
    %c0_21 = arith.constant 0 : index
    %27 = vector.load %arg5[%c0_19, %c0_20, %c0_21] : memref<9x128x128xbf16, #tpu.memory_space<vmem>>, vector<1x128x128xbf16>
    %28 = vector.shape_cast %27 : vector<1x128x128xbf16> to vector<128x128xbf16>
    %cst_22 = arith.constant dense<0.000000e+00> : vector<128x128xf32>
    %29 = tpu.matmul %26, %28, %cst_22 {dimension_numbers = #tpu.dot_dimension_numbers<[1], [0], [0], [1], [0, 0, 1, 1], [], []>} : vector<128x128xbf16>, vector<128x128xbf16>, vector<128x128xf32> -> vector<128x128xf32>
    %30 = vector.extract_strided_slice %24 {offsets = [1, 0, 0], sizes = [8, 16, 128], strides = [1, 1, 1]} : vector<10x16x128xbf16> to vector<8x16x128xbf16>
    %31 = vector.shape_cast %30 : vector<8x16x128xbf16> to vector<128x128xbf16>
    %c3 = arith.constant 3 : index
    %c0_23 = arith.constant 0 : index
    %c0_24 = arith.constant 0 : index
    %32 = vector.load %arg5[%c3, %c0_23, %c0_24] : memref<9x128x128xbf16, #tpu.memory_space<vmem>>, vector<1x128x128xbf16>
    %33 = vector.shape_cast %32 : vector<1x128x128xbf16> to vector<128x128xbf16>
    %cst_25 = arith.constant dense<0.000000e+00> : vector<128x128xf32>
    %34 = tpu.matmul %31, %33, %cst_25 {dimension_numbers = #tpu.dot_dimension_numbers<[1], [0], [0], [1], [0, 0, 1, 1], [], []>} : vector<128x128xbf16>, vector<128x128xbf16>, vector<128x128xf32> -> vector<128x128xf32>
    %35 = arith.addf %29, %34 : vector<128x128xf32>
    %36 = vector.extract_strided_slice %24 {offsets = [2, 0, 0], sizes = [8, 16, 128], strides = [1, 1, 1]} : vector<10x16x128xbf16> to vector<8x16x128xbf16>
    %37 = vector.shape_cast %36 : vector<8x16x128xbf16> to vector<128x128xbf16>
    %c6 = arith.constant 6 : index
    %c0_26 = arith.constant 0 : index
    %c0_27 = arith.constant 0 : index
    %38 = vector.load %arg5[%c6, %c0_26, %c0_27] : memref<9x128x128xbf16, #tpu.memory_space<vmem>>, vector<1x128x128xbf16>
    %39 = vector.shape_cast %38 : vector<1x128x128xbf16> to vector<128x128xbf16>
    %cst_28 = arith.constant dense<0.000000e+00> : vector<128x128xf32>
    %40 = tpu.matmul %37, %39, %cst_28 {dimension_numbers = #tpu.dot_dimension_numbers<[1], [0], [0], [1], [0, 0, 1, 1], [], []>} : vector<128x128xbf16>, vector<128x128xbf16>, vector<128x128xf32> -> vector<128x128xf32>
    %41 = arith.addf %35, %40 : vector<128x128xf32>
    %c0_29 = arith.constant 0 : index
    %c8_30 = arith.constant 8 : index
    %c0_31 = arith.constant 0 : index
    %42 = vector.load %arg10[%c0_29, %c8_30, %c0_31] : memref<10x32x128xbf16, #tpu.memory_space<vmem>>, vector<10x16x128xbf16>
    %43 = vector.extract_strided_slice %42 {offsets = [0, 0, 0], sizes = [8, 16, 128], strides = [1, 1, 1]} : vector<10x16x128xbf16> to vector<8x16x128xbf16>
    %44 = vector.shape_cast %43 : vector<8x16x128xbf16> to vector<128x128xbf16>
    %c1 = arith.constant 1 : index
    %c0_32 = arith.constant 0 : index
    %c0_33 = arith.constant 0 : index
    %45 = vector.load %arg5[%c1, %c0_32, %c0_33] : memref<9x128x128xbf16, #tpu.memory_space<vmem>>, vector<1x128x128xbf16>
    %46 = vector.shape_cast %45 : vector<1x128x128xbf16> to vector<128x128xbf16>
    %cst_34 = arith.constant dense<0.000000e+00> : vector<128x128xf32>
    %47 = tpu.matmul %44, %46, %cst_34 {dimension_numbers = #tpu.dot_dimension_numbers<[1], [0], [0], [1], [0, 0, 1, 1], [], []>} : vector<128x128xbf16>, vector<128x128xbf16>, vector<128x128xf32> -> vector<128x128xf32>
    %48 = arith.addf %41, %47 : vector<128x128xf32>
    %49 = vector.extract_strided_slice %42 {offsets = [1, 0, 0], sizes = [8, 16, 128], strides = [1, 1, 1]} : vector<10x16x128xbf16> to vector<8x16x128xbf16>
    %50 = vector.shape_cast %49 : vector<8x16x128xbf16> to vector<128x128xbf16>
    %c4 = arith.constant 4 : index
    %c0_35 = arith.constant 0 : index
    %c0_36 = arith.constant 0 : index
    %51 = vector.load %arg5[%c4, %c0_35, %c0_36] : memref<9x128x128xbf16, #tpu.memory_space<vmem>>, vector<1x128x128xbf16>
    %52 = vector.shape_cast %51 : vector<1x128x128xbf16> to vector<128x128xbf16>
    %cst_37 = arith.constant dense<0.000000e+00> : vector<128x128xf32>
    %53 = tpu.matmul %50, %52, %cst_37 {dimension_numbers = #tpu.dot_dimension_numbers<[1], [0], [0], [1], [0, 0, 1, 1], [], []>} : vector<128x128xbf16>, vector<128x128xbf16>, vector<128x128xf32> -> vector<128x128xf32>
    %54 = arith.addf %48, %53 : vector<128x128xf32>
    %55 = vector.extract_strided_slice %42 {offsets = [2, 0, 0], sizes = [8, 16, 128], strides = [1, 1, 1]} : vector<10x16x128xbf16> to vector<8x16x128xbf16>
    %56 = vector.shape_cast %55 : vector<8x16x128xbf16> to vector<128x128xbf16>
    %c7_38 = arith.constant 7 : index
    %c0_39 = arith.constant 0 : index
    %c0_40 = arith.constant 0 : index
    %57 = vector.load %arg5[%c7_38, %c0_39, %c0_40] : memref<9x128x128xbf16, #tpu.memory_space<vmem>>, vector<1x128x128xbf16>
    %58 = vector.shape_cast %57 : vector<1x128x128xbf16> to vector<128x128xbf16>
    %cst_41 = arith.constant dense<0.000000e+00> : vector<128x128xf32>
    %59 = tpu.matmul %56, %58, %cst_41 {dimension_numbers = #tpu.dot_dimension_numbers<[1], [0], [0], [1], [0, 0, 1, 1], [], []>} : vector<128x128xbf16>, vector<128x128xbf16>, vector<128x128xf32> -> vector<128x128xf32>
    %60 = arith.addf %54, %59 : vector<128x128xf32>
    %c0_42 = arith.constant 0 : index
    %c9 = arith.constant 9 : index
    %c0_43 = arith.constant 0 : index
    %61 = vector.load %arg10[%c0_42, %c9, %c0_43] : memref<10x32x128xbf16, #tpu.memory_space<vmem>>, vector<10x16x128xbf16>
    %62 = vector.extract_strided_slice %61 {offsets = [0, 0, 0], sizes = [8, 16, 128], strides = [1, 1, 1]} : vector<10x16x128xbf16> to vector<8x16x128xbf16>
    %63 = vector.shape_cast %62 : vector<8x16x128xbf16> to vector<128x128xbf16>
    %c2 = arith.constant 2 : index
    %c0_44 = arith.constant 0 : index
    %c0_45 = arith.constant 0 : index
    %64 = vector.load %arg5[%c2, %c0_44, %c0_45] : memref<9x128x128xbf16, #tpu.memory_space<vmem>>, vector<1x128x128xbf16>
    %65 = vector.shape_cast %64 : vector<1x128x128xbf16> to vector<128x128xbf16>
    %cst_46 = arith.constant dense<0.000000e+00> : vector<128x128xf32>
    %66 = tpu.matmul %63, %65, %cst_46 {dimension_numbers = #tpu.dot_dimension_numbers<[1], [0], [0], [1], [0, 0, 1, 1], [], []>} : vector<128x128xbf16>, vector<128x128xbf16>, vector<128x128xf32> -> vector<128x128xf32>
    %67 = arith.addf %60, %66 : vector<128x128xf32>
    %68 = vector.extract_strided_slice %61 {offsets = [1, 0, 0], sizes = [8, 16, 128], strides = [1, 1, 1]} : vector<10x16x128xbf16> to vector<8x16x128xbf16>
    %69 = vector.shape_cast %68 : vector<8x16x128xbf16> to vector<128x128xbf16>
    %c5 = arith.constant 5 : index
    %c0_47 = arith.constant 0 : index
    %c0_48 = arith.constant 0 : index
    %70 = vector.load %arg5[%c5, %c0_47, %c0_48] : memref<9x128x128xbf16, #tpu.memory_space<vmem>>, vector<1x128x128xbf16>
    %71 = vector.shape_cast %70 : vector<1x128x128xbf16> to vector<128x128xbf16>
    %cst_49 = arith.constant dense<0.000000e+00> : vector<128x128xf32>
    %72 = tpu.matmul %69, %71, %cst_49 {dimension_numbers = #tpu.dot_dimension_numbers<[1], [0], [0], [1], [0, 0, 1, 1], [], []>} : vector<128x128xbf16>, vector<128x128xbf16>, vector<128x128xf32> -> vector<128x128xf32>
    %73 = arith.addf %67, %72 : vector<128x128xf32>
    %74 = vector.extract_strided_slice %61 {offsets = [2, 0, 0], sizes = [8, 16, 128], strides = [1, 1, 1]} : vector<10x16x128xbf16> to vector<8x16x128xbf16>
    %75 = vector.shape_cast %74 : vector<8x16x128xbf16> to vector<128x128xbf16>
    %c8_50 = arith.constant 8 : index
    %c0_51 = arith.constant 0 : index
    %c0_52 = arith.constant 0 : index
    %76 = vector.load %arg5[%c8_50, %c0_51, %c0_52] : memref<9x128x128xbf16, #tpu.memory_space<vmem>>, vector<1x128x128xbf16>
    %77 = vector.shape_cast %76 : vector<1x128x128xbf16> to vector<128x128xbf16>
    %cst_53 = arith.constant dense<0.000000e+00> : vector<128x128xf32>
    %78 = tpu.matmul %75, %77, %cst_53 {dimension_numbers = #tpu.dot_dimension_numbers<[1], [0], [0], [1], [0, 0, 1, 1], [], []>} : vector<128x128xbf16>, vector<128x128xbf16>, vector<128x128xf32> -> vector<128x128xf32>
    %79 = arith.addf %73, %78 : vector<128x128xf32>
    %c0_54 = arith.constant 0 : index
    %c0_55 = arith.constant 0 : index
    %80 = vector.load %arg6[%c0_54, %c0_55] : memref<1x128xf32, #tpu.memory_space<vmem>>, vector<1x128xf32>
    %81 = vector.broadcast %80 : vector<1x128xf32> to vector<128x128xf32>
    %82 = arith.addf %79, %81 : vector<128x128xf32>
    %cst_56 = arith.constant 0.000000e+00 : f32
    %83 = vector.broadcast %cst_56 : f32 to vector<128x128xf32>
    %84 = arith.maximumf %82, %83 : vector<128x128xf32>
    %85 = arith.truncf %84 : vector<128x128xf32> to vector<128x128xbf16>
    %c0_57 = arith.constant 0 : index
    %c0_58 = arith.constant 0 : index
    %86 = vector.load %arg7[%c0_57, %c0_58] : memref<128x128xbf16, #tpu.memory_space<vmem>>, vector<128x128xbf16>
    %cst_59 = arith.constant dense<0.000000e+00> : vector<128x128xf32>
    %87 = tpu.matmul %85, %86, %cst_59 {dimension_numbers = #tpu.dot_dimension_numbers<[1], [0], [0], [1], [0, 0, 1, 1], [], []>} : vector<128x128xbf16>, vector<128x128xbf16>, vector<128x128xf32> -> vector<128x128xf32>
    %c0_60 = arith.constant 0 : index
    %c0_61 = arith.constant 0 : index
    %88 = vector.load %arg8[%c0_60, %c0_61] : memref<1x128xf32, #tpu.memory_space<vmem>>, vector<1x128xf32>
    %89 = vector.broadcast %88 : vector<1x128xf32> to vector<128x128xf32>
    %90 = arith.addf %87, %89 : vector<128x128xf32>
    %91 = vector.shape_cast %90 : vector<128x128xf32> to vector<8x16x128xf32>
    %c0_62 = arith.constant 0 : index
    %c0_63 = arith.constant 0 : index
    %c0_64 = arith.constant 0 : index
    %c0_65 = arith.constant 0 : index
    %92 = vector.load %arg9[%c0_62, %c0_63, %c0_64, %c0_65] : memref<1x8x16x128xf32, #tpu.memory_space<vmem>>, vector<1x8x16x128xf32>
    %93 = vector.shape_cast %92 : vector<1x8x16x128xf32> to vector<8x16x128xf32>
    %94 = vector.shape_cast %91 : vector<8x16x128xf32> to vector<1x8x16x128xf32>
    tpu.vector_store %arg9[%c0_62, %c0_63, %c0_64, %c0_65], %94 {strides = array<i32>} : memref<1x8x16x128xf32, #tpu.memory_space<vmem>>, vector<1x8x16x128xf32>,
    return
  }
  func.func @transform_0(%arg0: i32, %arg1: i32) -> (i32, i32, i32, i32) {
    %c0_i32 = arith.constant 0 : i32
    %c0_i32_0 = arith.constant 0 : i32
    %c0_i32_1 = arith.constant 0 : i32
    %c0_i32_2 = arith.constant 0 : i32
    return %arg0, %c0_i32, %c0_i32_0, %c0_i32_1 : i32, i32, i32, i32
  }
  func.func @transform_1(%arg0: i32, %arg1: i32) -> (i32, i32) {
    %c0_i32 = arith.constant 0 : i32
    %c0_i32_0 = arith.constant 0 : i32
    %c0_i32_1 = arith.constant 0 : i32
    return %c0_i32, %c0_i32_0 : i32, i32
  }
  func.func @transform_2(%arg0: i32, %arg1: i32) -> (i32, i32) {
    %c0_i32 = arith.constant 0 : i32
    %c0_i32_0 = arith.constant 0 : i32
    %c0_i32_1 = arith.constant 0 : i32
    return %c0_i32, %c0_i32_0 : i32, i32
  }
  func.func @transform_3(%arg0: i32, %arg1: i32) -> (i32, i32, i32) {
    %c0_i32 = arith.constant 0 : i32
    %c0_i32_0 = arith.constant 0 : i32
    %c0_i32_1 = arith.constant 0 : i32
    %c0_i32_2 = arith.constant 0 : i32
    return %c0_i32, %c0_i32_0, %c0_i32_1 : i32, i32, i32
  }
  func.func @transform_4(%arg0: i32, %arg1: i32) -> (i32, i32) {
    %c0_i32 = arith.constant 0 : i32
    %c0_i32_0 = arith.constant 0 : i32
    %c0_i32_1 = arith.constant 0 : i32
    return %c0_i32, %c0_i32_0 : i32, i32
  }
  func.func @transform_5(%arg0: i32, %arg1: i32) -> (i32, i32) {
    %c0_i32 = arith.constant 0 : i32
    %c0_i32_0 = arith.constant 0 : i32
    %c0_i32_1 = arith.constant 0 : i32
    return %c0_i32, %c0_i32_0 : i32, i32
  }
  func.func @transform_6(%arg0: i32, %arg1: i32) -> (i32, i32) {
    %c0_i32 = arith.constant 0 : i32
    %c0_i32_0 = arith.constant 0 : i32
    %c0_i32_1 = arith.constant 0 : i32
    return %c0_i32, %c0_i32_0 : i32, i32
  }
  func.func @transform_7(%arg0: i32, %arg1: i32) -> (i32, i32, i32, i32) {
    %c0_i32 = arith.constant 0 : i32
    %c0_i32_0 = arith.constant 0 : i32
    %c0_i32_1 = arith.constant 0 : i32
    return %arg0, %arg1, %c0_i32, %c0_i32_0 : i32, i32, i32, i32
  }
}

</mosaic_0001>

<llo_original>
// kernel: tpu_custom_call.1
$region0: #{tpu_custom_call.1}
  #allocation0 [shape = 'u32[]', space=smem, size = 0x4, offset = 0x4, fixed_abs, tag = 'smem constant byte address 0x4 - core index']
  #allocation1 [shape = 'u32[72,128]{1,0:T(1,128)}', space=vmem, size = 0x9000, scoped, tag = 'internal scratch']
  #allocation2 [shape = 'bf16[10,32,128]{2,1,0:T(8,128)(2,1)}', space=vmem, size = 0x14000, scoped, tag = 'scratch operand']
  %s0 = inlined_call_operand.hbm [shape: bf16[2,18,16,36], index: 0, kind: input, shape index: {}]
  %s1 = inlined_call_operand.hbm [shape: bf16[36,128], index: 1, kind: input, shape index: {}]
  %s2 = inlined_call_operand.vmem [shape: f32[1,128], index: 2, kind: input, shape index: {}]
  %s3 = inlined_call_operand.hbm [shape: bf16[9,128,128], index: 3, kind: input, shape index: {}]
  %s4 = inlined_call_operand.vmem [shape: f32[1,128], index: 4, kind: input, shape index: {}]
  %s5 = inlined_call_operand.hbm [shape: bf16[128,128], index: 5, kind: input, shape index: {}]
  %s6 = inlined_call_operand.vmem [shape: f32[1,128], index: 6, kind: input, shape index: {}]
  %s7 = inlined_call_operand.hbm [shape: f32[2,16,16,128], index: 7, kind: output, shape index: {}]
  %s8 = sld [smem:[#allocation0]]
  $region85: #{tpu_custom_call.1} parent=0
    _
  %s10 = ssub.s32 1, %s8
  %s11 = scalar_select 0, %s10, %s8
  $region1: #{tpu_custom_call.1} parent=0
    #allocation3 [shape = 'u8[147456]{0}', space=vmem, size = 0x24000, scoped, tag = 'input window, operand 0']
    #allocation4 [shape = 's32[2]{0}', space=sflag, size = 0x8, scoped, tag = 'scoped memory for tpu_custom_call.1']
    #allocation5 [shape = 's32[2]{0}', space=sflag, size = 0x8, scoped, tag = 'scoped memory for tpu_custom_call.1']
    #allocation6 [shape = 'u8[10240]{0}', space=vmem, size = 0x2800, scoped, tag = 'input window, operand 1, single buffered']
    #allocation7 [shape = 's32[1]{0}', space=sflag, size = 0x4, scoped, tag = 'scoped memory for tpu_custom_call.1']
    #allocation8 [shape = 'u8[294912]{0}', space=vmem, size = 0x48000, scoped, tag = 'input window, operand 3, single buffered']
    #allocation9 [shape = 'u8[32768]{0}', space=vmem, size = 0x8000, scoped, tag = 'input window, operand 5, single buffered']
    #allocation10 [shape = 's32[1]{0}', space=sflag, size = 0x4, scoped, tag = 'scoped memory for tpu_custom_call.1']
    #allocation11 [shape = 'u8[131072]{0}', space=vmem, size = 0x20000, scoped, tag = 'output window, operand 0']
    %12 = vsyncpa [#allocation4], 0
    %s13 = scalar_lea.sflag [#allocation4], 1
    %14 = vsyncpa %s13, 0
    %15 = vsyncpa [#allocation7], 0
    %16 = vsyncpa [#allocation10], 0
    %17 = vsyncpa [#allocation5], 0
    %s18 = scalar_lea.sflag [#allocation5], 1
    %19 = vsyncpa %s18, 0
    loop: start=0, step=1, limit=6
    $region2: #{tpu_custom_call.1} parent=1 // loop_pre_header
      _
    $region3: #{tpu_custom_call.1} parent=1 // loop_header
      %s21 = sphi 0, %s25
      %p22 = scmp.ge.s32.totalorder %s21, 6
      %s28 = sphi 0, %s40
      %s29 = sphi 0, %s36
      %s30 = sphi 0, %s28
      %s31 = sphi 0, %s29
      %s32 = sphi 0, %s30
      %s33 = sphi 0, %s31
      %s43 = sphi 0, %s45
      %s46 = sphi 0, %s43
      %s47 = sphi 0, %s46
      %s63 = sphi 0, %s47
      %s67 = sphi 0, %s67
      %s69 = sphi 0, %s67
      %s70 = sphi 0, %s69
      %s84 = sphi 0, %s70
      %s88 = sphi 0, %s88
      %s90 = sphi 0, %s88
      %s91 = sphi 0, %s90
      %s105 = sphi 0, %s91
      %s109 = sphi 0, %s109
      %s111 = sphi 0, %s109
      %s112 = sphi 0, %s111
      %s126 = sphi 0, %s112
      %s130 = sphi 0, %s130
      %s132 = sphi 0, %s130
      %s133 = sphi 0, %s132
      %s147 = sphi 0, %s133
      %s151 = sphi 0, %s151
      %s153 = sphi 0, %s151
      %s154 = sphi 0, %s153
      %s168 = sphi 0, %s154
      %s172 = sphi 0, %s172
      %s174 = sphi 0, %s172
      %s175 = sphi 0, %s174
      %s189 = sphi 0, %s175
      %s197 = sphi 0, %s199
      %s200 = sphi 0, %s197
      %s201 = sphi 0, %s200
      %s217 = sphi 0, %s201
    $region4: #{tpu_custom_call.1} parent=1 // loop_header_branch
      %24 = sbr.rel (%p22) target = $region8
    $region5: #{tpu_custom_call.1} parent=1 // loop_body
      %s26 = ssub.s32 %s21, 1
      %s27 = ssub.s32 %s21, 2
      %s34 = sadd.s32 1, %s29
      %p35 = scmp.ge.s32.totalorder %s34, 2
      %s36 = scalar_select %p35, 0, %s34
      %s37 = sadd.s32 1, %s28
      %s38 = scalar_select %p35, %s37, %s28
      %p39 = scmp.ge.s32.totalorder %s38, 2
      %s40 = scalar_select %p39, 0, %s38
      %s41 = ssub.s32 %s28, %s40
      %p42 = scmp.eq.s32.totalorder %s41, 0
      %s44 = sadd.s32 %s43, 1
      %s45 = scalar_select %p42, %s43, %s44
      %p48 = pneg %p42
      %p49 = scmp.eq.s32.totalorder %s21, 3
      %p50 = por %p48, %p49
      %p51 = scmp.ne.s32.totalorder %s43, %s46
      %p52 = scmp.eq.s32.totalorder %s21, 0
      %p53 = por %p51, %p52
      %p54 = scmp.ne.s32.totalorder %s43, %s46
      %p55 = scmp.eq.s32.totalorder %s26, 3
      %p56 = por %p54, %p55
      %p57 = scmp.ne.s32.totalorder %s46, %s47
      %p58 = scmp.eq.s32.totalorder %s26, 0
      %p59 = por %p57, %p58
      %p60 = scmp.ne.s32.totalorder %s46, %s47
      %p61 = scmp.eq.s32.totalorder %s27, 3
      %p62 = por %p60, %p61
      %p64 = scmp.ne.s32.totalorder %s47, %s63
      %p65 = scmp.eq.s32.totalorder %s27, 0
      %p66 = por %p64, %p65
      %s68 = sadd.s32 %s67, 1
      %p71 = scmp.eq.s32.totalorder %s21, 3
      %p72 = scmp.ne.s32.totalorder %s67, %s69
      %p73 = scmp.eq.s32.totalorder %s21, 0
      %p74 = por %p72, %p73
      %p75 = scmp.ne.s32.totalorder %s67, %s69
      %p76 = scmp.eq.s32.totalorder %s26, 3
      %p77 = por %p75, %p76
      %p78 = scmp.ne.s32.totalorder %s69, %s70
      %p79 = scmp.eq.s32.totalorder %s26, 0
      %p80 = por %p78, %p79
      %p81 = scmp.ne.s32.totalorder %s69, %s70
      %p82 = scmp.eq.s32.totalorder %s27, 3
      %p83 = por %p81, %p82
      %p85 = scmp.ne.s32.totalorder %s70, %s84
      %p86 = scmp.eq.s32.totalorder %s27, 0
      %p87 = por %p85, %p86
      %s89 = sadd.s32 %s88, 1
      %p92 = scmp.eq.s32.totalorder %s21, 3
      %p93 = scmp.ne.s32.totalorder %s88, %s90
      %p94 = scmp.eq.s32.totalorder %s21, 0
      %p95 = por %p93, %p94
      %p96 = scmp.ne.s32.totalorder %s88, %s90
      %p97 = scmp.eq.s32.totalorder %s26, 3
      %p98 = por %p96, %p97
      %p99 = scmp.ne.s32.totalorder %s90, %s91
      %p100 = scmp.eq.s32.totalorder %s26, 0
      %p101 = por %p99, %p100
      %p102 = scmp.ne.s32.totalorder %s90, %s91
      %p103 = scmp.eq.s32.totalorder %s27, 3
      %p104 = por %p102, %p103
      %p106 = scmp.ne.s32.totalorder %s91, %s105
      %p107 = scmp.eq.s32.totalorder %s27, 0
      %p108 = por %p106, %p107
      %s110 = sadd.s32 %s109, 1
      %p113 = scmp.eq.s32.totalorder %s21, 3
      %p114 = scmp.ne.s32.totalorder %s109, %s111
      %p115 = scmp.eq.s32.totalorder %s21, 0
      %p116 = por %p114, %p115
      %p117 = scmp.ne.s32.totalorder %s109, %s111
      %p118 = scmp.eq.s32.totalorder %s26, 3
      %p119 = por %p117, %p118
      %p120 = scmp.ne.s32.totalorder %s111, %s112
      %p121 = scmp.eq.s32.totalorder %s26, 0
      %p122 = por %p120, %p121
      %p123 = scmp.ne.s32.totalorder %s111, %s112
      %p124 = scmp.eq.s32.totalorder %s27, 3
      %p125 = por %p123, %p124
      %p127 = scmp.ne.s32.totalorder %s112, %s126
      %p128 = scmp.eq.s32.totalorder %s27, 0
      %p129 = por %p127, %p128
      %s131 = sadd.s32 %s130, 1
      %p134 = scmp.eq.s32.totalorder %s21, 3
      %p135 = scmp.ne.s32.totalorder %s130, %s132
      %p136 = scmp.eq.s32.totalorder %s21, 0
      %p137 = por %p135, %p136
      %p138 = scmp.ne.s32.totalorder %s130, %s132
      %p139 = scmp.eq.s32.totalorder %s26, 3
      %p140 = por %p138, %p139
      %p141 = scmp.ne.s32.totalorder %s132, %s133
      %p142 = scmp.eq.s32.totalorder %s26, 0
      %p143 = por %p141, %p142
      %p144 = scmp.ne.s32.totalorder %s132, %s133
      %p145 = scmp.eq.s32.totalorder %s27, 3
      %p146 = por %p144, %p145
      %p148 = scmp.ne.s32.totalorder %s133, %s147
      %p149 = scmp.eq.s32.totalorder %s27, 0
      %p150 = por %p148, %p149
      %s152 = sadd.s32 %s151, 1
      %p155 = scmp.eq.s32.totalorder %s21, 3
      %p156 = scmp.ne.s32.totalorder %s151, %s153
      %p157 = scmp.eq.s32.totalorder %s21, 0
      %p158 = por %p156, %p157
      %p159 = scmp.ne.s32.totalorder %s151, %s153
      %p160 = scmp.eq.s32.totalorder %s26, 3
      %p161 = por %p159, %p160
      %p162 = scmp.ne.s32.totalorder %s153, %s154
      %p163 = scmp.eq.s32.totalorder %s26, 0
      %p164 = por %p162, %p163
      %p165 = scmp.ne.s32.totalorder %s153, %s154
      %p166 = scmp.eq.s32.totalorder %s27, 3
      %p167 = por %p165, %p166
      %p169 = scmp.ne.s32.totalorder %s154, %s168
      %p170 = scmp.eq.s32.totalorder %s27, 0
      %p171 = por %p169, %p170
      %s173 = sadd.s32 %s172, 1
      %p176 = scmp.eq.s32.totalorder %s21, 3
      %p177 = scmp.ne.s32.totalorder %s172, %s174
      %p178 = scmp.eq.s32.totalorder %s21, 0
      %p179 = por %p177, %p178
      %p180 = scmp.ne.s32.totalorder %s172, %s174
      %p181 = scmp.eq.s32.totalorder %s26, 3
      %p182 = por %p180, %p181
      %p183 = scmp.ne.s32.totalorder %s174, %s175
      %p184 = scmp.eq.s32.totalorder %s26, 0
      %p185 = por %p183, %p184
      %p186 = scmp.ne.s32.totalorder %s174, %s175
      %p187 = scmp.eq.s32.totalorder %s27, 3
      %p188 = por %p186, %p187
      %p190 = scmp.ne.s32.totalorder %s175, %s189
      %p191 = scmp.eq.s32.totalorder %s27, 0
      %p192 = por %p190, %p191
      %s193 = ssub.s32 %s28, %s40
      %s194 = ssub.s32 %s29, %s36
      %s195 = sor.u32 %s193, %s194
      %p196 = scmp.eq.s32.totalorder %s195, 0
      %s198 = sadd.s32 %s197, 1
      %s199 = scalar_select %p196, %s197, %s198
      %p202 = pneg %p196
      %p203 = scmp.eq.s32.totalorder %s21, 3
      %p204 = por %p202, %p203
      %p205 = scmp.ne.s32.totalorder %s197, %s200
      %p206 = scmp.eq.s32.totalorder %s21, 0
      %p207 = por %p205, %p206
      %p208 = scmp.ne.s32.totalorder %s197, %s200
      %p209 = scmp.eq.s32.totalorder %s26, 3
      %p210 = por %p208, %p209
      %p211 = scmp.ne.s32.totalorder %s200, %s201
      %p212 = scmp.eq.s32.totalorder %s26, 0
      %p213 = por %p211, %p212
      %p214 = scmp.ne.s32.totalorder %s200, %s201
      %p215 = scmp.eq.s32.totalorder %s27, 3
      %p216 = por %p214, %p215
      %p218 = scmp.ne.s32.totalorder %s201, %s217
      %p219 = scmp.eq.s32.totalorder %s27, 0
      %p220 = por %p218, %p219
      %p221 = scmp.le.s32.totalorder 1, %s21
      %p222 = scmp.lt.s32.totalorder %s21, 5
      %p223 = pnand %p221, %p222
      %p224 = pneg %p223
      // Predicated region
      $region9: #{tpu_custom_call.1} parent=5 // pred_check
        _
      $region10: #{tpu_custom_call.1} parent=5 // pred_check_branch
        %226 = sbr.rel (%p223) target = $region12
      $region11: #{tpu_custom_call.1} parent=5 // pred_region
        %s227 = ssub.s32 %s21, 1
        // Predicated region
        $region13: #{tpu_custom_call.1} parent=11 // pred_check
          %p228 = pneg %p80
        $region14: #{tpu_custom_call.1} parent=11 // pred_check_branch
          %230 = sbr.rel (%p228) target = $region16
        $region15: #{tpu_custom_call.1} parent=11 // pred_region
          %232 = vsyncadd [#allocation7], 0
          %s233 = sshll.u32 %s1, 4
          %s234 = int_to_ptr.hbm [resolvable:$true] %s233
          %s235 = sshll.u32 [#allocation6], 4
          %s236 = int_to_ptr.vmem [resolvable:$true] %s235
          %241 = dma.hbm_to_vmem [thread:$0]  %s234, 320, %s236, [#allocation7], 64, 64, 4
        $region16: #{tpu_custom_call.1} parent=11 // pred_fallthru
          _
        // Predicated region
        $region17: #{tpu_custom_call.1} parent=11 // pred_check
          %p242 = pneg %p101
        $region18: #{tpu_custom_call.1} parent=11 // pred_check_branch
          %244 = sbr.rel (%p242) target = $region20
        $region19: #{tpu_custom_call.1} parent=11 // pred_region
          _
        $region20: #{tpu_custom_call.1} parent=11 // pred_fallthru
          _
        // Predicated region
        $region21: #{tpu_custom_call.1} parent=11 // pred_check
          %p245 = pneg %p122
        $region22: #{tpu_custom_call.1} parent=11 // pred_check_branch
          %247 = sbr.rel (%p245) target = $region24
        $region23: #{tpu_custom_call.1} parent=11 // pred_region
          %249 = vsyncadd [#allocation7], 0
          %s250 = sshll.u32 %s3, 4
          %s251 = int_to_ptr.hbm [resolvable:$true] %s250
          %s252 = sshll.u32 [#allocation8], 4
          %s253 = int_to_ptr.vmem [resolvable:$true] %s252
          %258 = dma.hbm_to_vmem [thread:$0]  %s251, 9216, %s253, [#allocation7], 64, 64, 4
        $region24: #{tpu_custom_call.1} parent=11 // pred_fallthru
          _
        // Predicated region
        $region25: #{tpu_custom_call.1} parent=11 // pred_check
          %p259 = pneg %p143
        $region26: #{tpu_custom_call.1} parent=11 // pred_check_branch
          %261 = sbr.rel (%p259) target = $region28
        $region27: #{tpu_custom_call.1} parent=11 // pred_region
          _
        $region28: #{tpu_custom_call.1} parent=11 // pred_fallthru
          _
        // Predicated region
        $region29: #{tpu_custom_call.1} parent=11 // pred_check
          %p262 = pneg %p164
        $region30: #{tpu_custom_call.1} parent=11 // pred_check_branch
          %264 = sbr.rel (%p262) target = $region32
        $region31: #{tpu_custom_call.1} parent=11 // pred_region
          %266 = vsyncadd [#allocation10], 0
          %s267 = sshll.u32 %s5, 4
          %s268 = int_to_ptr.hbm [resolvable:$true] %s267
          %s269 = sshll.u32 [#allocation9], 4
          %s270 = int_to_ptr.vmem [resolvable:$true] %s269
          %275 = dma.hbm_to_vmem [thread:$0]  %s268, 1024, %s270, [#allocation10], 64, 64, 4
        $region32: #{tpu_custom_call.1} parent=11 // pred_fallthru
          _
        // Predicated region
        $region33: #{tpu_custom_call.1} parent=11 // pred_check
          %p276 = pneg %p185
        $region34: #{tpu_custom_call.1} parent=11 // pred_check_branch
          %278 = sbr.rel (%p276) target = $region36
        $region35: #{tpu_custom_call.1} parent=11 // pred_region
          _
        $region36: #{tpu_custom_call.1} parent=11 // pred_fallthru
          _
      $region12: #{tpu_custom_call.1} parent=5 // pred_fallthru
        _
      %p279 = scmp.lt.s32.totalorder %s21, 4
      // Predicated region
      $region37: #{tpu_custom_call.1} parent=5 // pred_check
        %p280 = pneg %p279
      $region38: #{tpu_custom_call.1} parent=5 // pred_check_branch
        %282 = sbr.rel (%p280) target = $region40
      $region39: #{tpu_custom_call.1} parent=5 // pred_region
        // Predicated region
        $region41: #{tpu_custom_call.1} parent=39 // pred_check
          %p283 = pneg %p53
        $region42: #{tpu_custom_call.1} parent=39 // pred_check_branch
          %285 = sbr.rel (%p283) target = $region44
        $region43: #{tpu_custom_call.1} parent=39 // pred_region
          %s286 = sand.u32 %s43, 1
          %s287 = scalar_lea.sflag [#allocation4], %s286
          %s288 = sand.u32 %s43, 1
          %s289 = smul.addr %s288, 144
          %s290 = scalar_lea.vmem [#allocation3], %s289
          %292 = vsyncadd %s287, 0
          %s293 = smul.addr %s28, 36
          %s294 = smul.addr %s293, 4
          %s295 = scalar_lea.hbm %s0, %s294
          %s296 = sshll.u32 %s295, 4
          %s297 = int_to_ptr.hbm [resolvable:$true] %s296
          %s298 = sshll.u32 %s290, 4
          %s299 = int_to_ptr.vmem [resolvable:$true] %s298
          %304 = dma.hbm_to_vmem [thread:$0]  %s297, 2304, %s299, %s287, 64, 64, 4
        $region44: #{tpu_custom_call.1} parent=39 // pred_fallthru
          _
      $region40: #{tpu_custom_call.1} parent=5 // pred_fallthru
        _
      %p305 = scmp.le.s32.totalorder 1, %s21
      %p306 = scmp.lt.s32.totalorder %s21, 5
      %p307 = pnand %p305, %p306
      %p308 = pneg %p307
      // Predicated region
      $region45: #{tpu_custom_call.1} parent=5 // pred_check
        _
      $region46: #{tpu_custom_call.1} parent=5 // pred_check_branch
        %310 = sbr.rel (%p307) target = $region48
      $region47: #{tpu_custom_call.1} parent=5 // pred_region
        %s311 = ssub.s32 %s21, 1
        %s312 = sand.u32 %s46, 1
        %s313 = scalar_lea.sflag [#allocation4], %s312
        %s314 = sand.u32 %s46, 1
        %s315 = smul.addr %s314, 144
        %s316 = scalar_lea.vmem [#allocation3], %s315
        // Predicated region
        $region49: #{tpu_custom_call.1} parent=47 // pred_check
          %p317 = pneg %p59
        $region50: #{tpu_custom_call.1} parent=47 // pred_check_branch
          %319 = sbr.rel (%p317) target = $region52
        $region51: #{tpu_custom_call.1} parent=47 // pred_region
          %321 = dma.done %s313, 2304
        $region52: #{tpu_custom_call.1} parent=47 // pred_fallthru
          _
        // Predicated region
        $region53: #{tpu_custom_call.1} parent=47 // pred_check
          %p322 = pneg %p80
        $region54: #{tpu_custom_call.1} parent=47 // pred_check_branch
          %324 = sbr.rel (%p322) target = $region56
        $region55: #{tpu_custom_call.1} parent=47 // pred_region
          %326 = dma.done [#allocation7], 320
        $region56: #{tpu_custom_call.1} parent=47 // pred_fallthru
          _
        // Predicated region
        $region57: #{tpu_custom_call.1} parent=47 // pred_check
          %p327 = pneg %p122
        $region58: #{tpu_custom_call.1} parent=47 // pred_check_branch
          %329 = sbr.rel (%p327) target = $region60
        $region59: #{tpu_custom_call.1} parent=47 // pred_region
          %331 = dma.done [#allocation7], 9216
        $region60: #{tpu_custom_call.1} parent=47 // pred_fallthru
          _
        // Predicated region
        $region61: #{tpu_custom_call.1} parent=47 // pred_check
          %p332 = pneg %p164
        $region62: #{tpu_custom_call.1} parent=47 // pred_check_branch
          %334 = sbr.rel (%p332) target = $region64
        $region63: #{tpu_custom_call.1} parent=47 // pred_region
          %336 = dma.done [#allocation10], 1024
        $region64: #{tpu_custom_call.1} parent=47 // pred_fallthru
          _
        %s337 = sand.u32 %s46, 1
        %s338 = scalar_lea.sflag [#allocation4], %s337
        %s339 = sand.u32 %s46, 1
        %s340 = smul.addr %s339, 144
        %s341 = scalar_lea.vmem [#allocation3], %s340
        %p342 = pneg %p59
        %p343 = pneg %p56
        %p344 = pneg %p80
        %p345 = pneg %p77
        %p346 = pneg %p101
        %p347 = pneg %p98
        %p348 = pneg %p122
        %p349 = pneg %p119
        %p350 = pneg %p143
        %p351 = pneg %p140
        %p352 = pneg %p164
        %p353 = pneg %p161
        %p354 = pneg %p185
        %p355 = pneg %p182
        %p356 = pneg %p213
        %p357 = pneg %p210
        %s358 = sand.u32 %s200, 1
        %s359 = scalar_lea.sflag [#allocation5], %s358
        %s360 = sand.u32 %s200, 1
        %s361 = smul.addr %s360, 128
        %s362 = scalar_lea.vmem [#allocation11], %s361
        %s363 = smul.u32 8, %s31
        %s365 = smul.u32 %s31, 8
        %s366 = smul.u32 %s365, 2
        %s367 = smul.addr %s366, 4
        %s368 = scalar_lea.vmem %s316, %s367 [#allocation3]
        %v369 = vld [vmem:[%s368] sm:$0xf]
        %v370 = vld [vmem:[%s368 + $0x4] sm:$0xf]
        %v371 = vld [vmem:[%s368 + $0x8] sm:$0xf]
        %v372 = vld [vmem:[%s368 + $0xc] sm:$0xf]
        %v373 = vld [vmem:[%s368 + $0x10] sm:$0xf]
        %v374 = vld [vmem:[%s368 + $0x14] sm:$0xf]
        %v375 = vld [vmem:[%s368 + $0x18] sm:$0xf]
        %v376 = vld [vmem:[%s368 + $0x1c] sm:$0xf]
        %v377 = vld [vmem:[%s368 + $0x20] sm:$0xf]
        %v378 = vld [vmem:[%s368 + $0x24] sm:$0xf]
        %v379 = vld [vmem:[%s368 + $0x28] sm:$0xf]
        %v380 = vld [vmem:[%s368 + $0x2c] sm:$0xf]
        %v381 = vld [vmem:[%s368 + $0x30] sm:$0xf]
        %v382 = vld [vmem:[%s368 + $0x34] sm:$0xf]
        %v383 = vld [vmem:[%s368 + $0x38] sm:$0xf]
        %v384 = vld [vmem:[%s368 + $0x3c] sm:$0xf]
        %v385 = vld [vmem:[%s368 + $0x40] sm:$0xf]
        %v386 = vld [vmem:[%s368 + $0x44] sm:$0xf]
        %v387 = vld [vmem:[%s368 + $0x48] sm:$0xf]
        %v388 = vld [vmem:[%s368 + $0x4c] sm:$0xf]
        %v389 = vld [vmem:[#allocation6] sm:$0xf]
        %v390 = vld [vmem:[#allocation6 + $0x4] sm:$0xf]
        %v391 = vld [vmem:[#allocation6 + $0x8] sm:$0xf]
        %v392 = vld [vmem:[#allocation6 + $0xc] sm:$0xf]
        %v393 = vld [vmem:[#allocation6 + $0x10] sm:$0x3]
        %v394 = vld [vmem:[%s2] sm:$0x1]
        %v396 = vperm.slane %v394, 0
        %v418 = vunpack.c.l.b16 %v369
        %v419 = vunpack.c.l.b16 %v370
        %v420 = vunpack.c.l.b16 %v371
        %v421 = vunpack.c.l.b16 %v372
        %v422 = vunpack.c.l.b16 %v373
        %v423 = vunpack.c.l.b16 %v374
        %v424 = vunpack.c.l.b16 %v375
        %v425 = vunpack.c.l.b16 %v376
        %v426 = vunpack.c.l.b16 %v377
        %v427 = vunpack.c.l.b16 %v378
        %v428 = vunpack.c.l.b16 %v379
        %v429 = vunpack.c.l.b16 %v380
        %v430 = vunpack.c.l.b16 %v381
        %v431 = vunpack.c.l.b16 %v382
        %v432 = vunpack.c.l.b16 %v383
        %v433 = vunpack.c.l.b16 %v384
        %v434 = vunpack.c.l.b16 %v385
        %v435 = vunpack.c.l.b16 %v386
        %v436 = vunpack.c.l.b16 %v387
        %v437 = vunpack.c.l.b16 %v388
        %v438 = vpack.c.b16 %v419, %v418
        %v439 = vpack.c.b16 %v421, %v420
        %v440 = vpack.c.b16 %v423, %v422
        %v441 = vpack.c.b16 %v425, %v424
        %v442 = vpack.c.b16 %v427, %v426
        %v443 = vpack.c.b16 %v429, %v428
        %v444 = vpack.c.b16 %v431, %v430
        %v445 = vpack.c.b16 %v433, %v432
        %v446 = vpack.c.b16 %v435, %v434
        %v447 = vpack.c.b16 %v437, %v436
        %v453 = vunpack.c.l.b16 %v389
        %v454 = vunpack.c.l.b16 %v390
        %v455 = vunpack.c.l.b16 %v391
        %v456 = vunpack.c.l.b16 %v392
        %v457 = vunpack.c.l.b16 %v393
        %v458 = vpack.c.b16 %v454, %v453
        %v459 = vpack.c.b16 %v456, %v455
        %v460 = vpack.c.b16 %v457, %v457
        %vm463 = vcmask 293888
        %v465 = vsel %vm463, %v438, 0
        %v468 = vsel %vm463, %v439, 0
        %v471 = vsel %vm463, %v440, 0
        %v474 = vsel %vm463, %v441, 0
        %v477 = vsel %vm463, %v442, 0
        %v480 = vsel %vm463, %v443, 0
        %v483 = vsel %vm463, %v444, 0
        %v486 = vsel %vm463, %v445, 0
        %v489 = vsel %vm463, %v446, 0
        %v492 = vsel %vm463, %v447, 0
        %vm494 = vcmask 1041408
        %v496 = vsel %vm494, %v460, 0
        %498 = vmatpush.bf16.msra.mxu0 0
        %499 = vmatpush.bf16.msra.mxu0 0
        %500 = vmatpush.bf16.msra.mxu0 0
        %501 = vmatpush.bf16.msra.mxu0 0
        %502 = vmatpush.bf16.msra.mxu0 0
        %503 = vmatpush.bf16.msra.mxu0 %v496
        %504 = vmatpush.bf16.msra.mxu0 %v459
        %505 = vmatpush.bf16.msra.mxu0 %v458
        %506 = vmatmul.bf16.gmra.mxu0 %v465
        %v507 = vpop.f32.mrf.mxu0
        %v508 = vadd.f32 %v396, %v507
        %v509 = vpop.f32.mrf.mxu0
        %v510 = vadd.f32 %v396, %v509
        %511 = vmatmul.bf16.gmra.mxu0 %v468
        %v512 = vpop.f32.mrf.mxu0
        %v513 = vadd.f32 %v396, %v512
        %v514 = vpop.f32.mrf.mxu0
        %v515 = vadd.f32 %v396, %v514
        %516 = vmatmul.bf16.gmra.mxu0 %v471
        %v517 = vpop.f32.mrf.mxu0
        %v518 = vadd.f32 %v396, %v517
        %v519 = vpop.f32.mrf.mxu0
        %v520 = vadd.f32 %v396, %v519
        %521 = vmatmul.bf16.gmra.mxu0 %v474
        %v522 = vpop.f32.mrf.mxu0
        %v523 = vadd.f32 %v396, %v522
        %v524 = vpop.f32.mrf.mxu0
        %v525 = vadd.f32 %v396, %v524
        %526 = vmatmul.bf16.gmra.mxu0 %v477
        %v527 = vpop.f32.mrf.mxu0
        %v528 = vadd.f32 %v396, %v527
        %v529 = vpop.f32.mrf.mxu0
        %v530 = vadd.f32 %v396, %v529
        %531 = vmatmul.bf16.gmra.mxu0 %v480
        %v532 = vpop.f32.mrf.mxu0
        %v533 = vadd.f32 %v396, %v532
        %v534 = vpop.f32.mrf.mxu0
        %v535 = vadd.f32 %v396, %v534
        %536 = vmatmul.bf16.gmra.mxu0 %v483
        %v537 = vpop.f32.mrf.mxu0
        %v538 = vadd.f32 %v396, %v537
        %v539 = vpop.f32.mrf.mxu0
        %v540 = vadd.f32 %v396, %v539
        %541 = vmatmul.bf16.gmra.mxu0 %v486
        %v542 = vpop.f32.mrf.mxu0
        %v543 = vadd.f32 %v396, %v542
        %v544 = vpop.f32.mrf.mxu0
        %v545 = vadd.f32 %v396, %v544
        %546 = vmatmul.bf16.gmra.mxu0 %v489
        %v547 = vpop.f32.mrf.mxu0
        %v548 = vadd.f32 %v396, %v547
        %v549 = vpop.f32.mrf.mxu0
        %v550 = vadd.f32 %v396, %v549
        %551 = vmatmul.bf16.gmra.mxu0 %v492
        %v552 = vpop.f32.mrf.mxu0
        %v553 = vadd.f32 %v396, %v552
        %v554 = vpop.f32.mrf.mxu0
        %v555 = vadd.f32 %v396, %v554
        %556 = vdwg.mxu0
        %v557 = vmax.f32 %v508, 0.0
        %v558 = vmax.f32 %v510, 0.0
        %v559 = vmax.f32 %v513, 0.0
        %v560 = vmax.f32 %v515, 0.0
        %v561 = vmax.f32 %v518, 0.0
        %v562 = vmax.f32 %v520, 0.0
        %v563 = vmax.f32 %v523, 0.0
        %v564 = vmax.f32 %v525, 0.0
        %v565 = vmax.f32 %v528, 0.0
        %v566 = vmax.f32 %v530, 0.0
        %v567 = vmax.f32 %v533, 0.0
        %v568 = vmax.f32 %v535, 0.0
        %v569 = vmax.f32 %v538, 0.0
        %v570 = vmax.f32 %v540, 0.0
        %v571 = vmax.f32 %v543, 0.0
        %v572 = vmax.f32 %v545, 0.0
        %v573 = vmax.f32 %v548, 0.0
        %v574 = vmax.f32 %v550, 0.0
        %v575 = vmax.f32 %v553, 0.0
        %v576 = vmax.f32 %v555, 0.0
        %v577 = vpack.c.bf16 %v557, %v557
        %v578 = vpack.c.bf16 %v558, %v558
        %v579 = vpack.c.bf16 %v559, %v559
        %v580 = vpack.c.bf16 %v560, %v560
        %v581 = vpack.c.bf16 %v561, %v561
        %v582 = vpack.c.bf16 %v562, %v562
        %v583 = vpack.c.bf16 %v563, %v563
        %v584 = vpack.c.bf16 %v564, %v564
        %v585 = vpack.c.bf16 %v565, %v565
        %v586 = vpack.c.bf16 %v566, %v566
        %v587 = vpack.c.bf16 %v567, %v567
        %v588 = vpack.c.bf16 %v568, %v568
        %v589 = vpack.c.bf16 %v569, %v569
        %v590 = vpack.c.bf16 %v570, %v570
        %v591 = vpack.c.bf16 %v571, %v571
        %v592 = vpack.c.bf16 %v572, %v572
        %v593 = vpack.c.bf16 %v573, %v573
        %v594 = vpack.c.bf16 %v574, %v574
        %v595 = vpack.c.bf16 %v575, %v575
        %v596 = vpack.c.bf16 %v576, %v576
        %597 = vst [vmem:[#allocation2 + $0x4] sm:$0xf] %v577
        %598 = vst [vmem:[#allocation2 + $0x8] sm:$0xf] %v578
        %599 = vst [vmem:[#allocation2 + $0x14] sm:$0xf] %v579
        %600 = vst [vmem:[#allocation2 + $0x18] sm:$0xf] %v580
        %601 = vst [vmem:[#allocation2 + $0x24] sm:$0xf] %v581
        %602 = vst [vmem:[#allocation2 + $0x28] sm:$0xf] %v582
        %603 = vst [vmem:[#allocation2 + $0x34] sm:$0xf] %v583
        %604 = vst [vmem:[#allocation2 + $0x38] sm:$0xf] %v584
        %605 = vst [vmem:[#allocation2 + $0x44] sm:$0xf] %v585
        %606 = vst [vmem:[#allocation2 + $0x48] sm:$0xf] %v586
        %607 = vst [vmem:[#allocation2 + $0x54] sm:$0xf] %v587
        %608 = vst [vmem:[#allocation2 + $0x58] sm:$0xf] %v588
        %609 = vst [vmem:[#allocation2 + $0x64] sm:$0xf] %v589
        %610 = vst [vmem:[#allocation2 + $0x68] sm:$0xf] %v590
        %611 = vst [vmem:[#allocation2 + $0x74] sm:$0xf] %v591
        %612 = vst [vmem:[#allocation2 + $0x78] sm:$0xf] %v592
        %613 = vst [vmem:[#allocation2 + $0x84] sm:$0xf] %v593
        %614 = vst [vmem:[#allocation2 + $0x88] sm:$0xf] %v594
        %615 = vst [vmem:[#allocation2 + $0x94] sm:$0xf] %v595
        %616 = vst [vmem:[#allocation2 + $0x98] sm:$0xf] %v596
        %617 = vst [vmem:[#allocation2] sm:$0xf] 0
        %618 = vst [vmem:[#allocation2 + $0x10] sm:$0xf] 0
        %619 = vst [vmem:[#allocation2 + $0x20] sm:$0xf] 0
        %620 = vst [vmem:[#allocation2 + $0x30] sm:$0xf] 0
        %621 = vst [vmem:[#allocation2 + $0x40] sm:$0xf] 0
        %622 = vst [vmem:[#allocation2 + $0x50] sm:$0xf] 0
        %623 = vst [vmem:[#allocation2 + $0x60] sm:$0xf] 0
        %624 = vst [vmem:[#allocation2 + $0x70] sm:$0xf] 0
        %625 = vst [vmem:[#allocation2 + $0x80] sm:$0xf] 0
        %626 = vst [vmem:[#allocation2 + $0x90] sm:$0xf] 0
        %627 = vst [vmem:[#allocation2 + $0xc] sm:$0xf] 0
        %628 = vst [vmem:[#allocation2 + $0x1c] sm:$0xf] 0
        %629 = vst [vmem:[#allocation2 + $0x2c] sm:$0xf] 0
        %630 = vst [vmem:[#allocation2 + $0x3c] sm:$0xf] 0
        %631 = vst [vmem:[#allocation2 + $0x4c] sm:$0xf] 0
        %632 = vst [vmem:[#allocation2 + $0x5c] sm:$0xf] 0
        %633 = vst [vmem:[#allocation2 + $0x6c] sm:$0xf] 0
        %634 = vst [vmem:[#allocation2 + $0x7c] sm:$0xf] 0
        %635 = vst [vmem:[#allocation2 + $0x8c] sm:$0xf] 0
        %636 = vst [vmem:[#allocation2 + $0x9c] sm:$0xf] 0
        %p637 = scmp.eq.s32.totalorder %s31, 0
        // Predicated region
        $region65: #{tpu_custom_call.1} parent=47 // pred_check
          %p638 = pneg %p637
        $region66: #{tpu_custom_call.1} parent=47 // pred_check_branch
          %640 = sbr.rel (%p638) target = $region68
        $region67: #{tpu_custom_call.1} parent=47 // pred_region
          %641 = vst [vmem:[#allocation2] sm:$0xf] 0
          %642 = vst [vmem:[#allocation2 + $0x4] sm:$0xf] 0
          %643 = vst [vmem:[#allocation2 + $0x8] sm:$0xf] 0
          %644 = vst [vmem:[#allocation2 + $0xc] sm:$0xf] 0
        $region68: #{tpu_custom_call.1} parent=47 // pred_fallthru
          _
        %p645 = scmp.eq.s32.totalorder %s31, 1
        // Predicated region
        $region69: #{tpu_custom_call.1} parent=47 // pred_check
          %p646 = pneg %p645
        $region70: #{tpu_custom_call.1} parent=47 // pred_check_branch
          %648 = sbr.rel (%p646) target = $region72
        $region71: #{tpu_custom_call.1} parent=47 // pred_region
          %s649 = scalar_lea.vmem [#allocation2], 144
          %650 = vst [vmem:[%s649] sm:$0xf] 0
          %651 = vst [vmem:[%s649 + $0x4] sm:$0xf] 0
          %652 = vst [vmem:[%s649 + $0x8] sm:$0xf] 0
          %653 = vst [vmem:[%s649 + $0xc] sm:$0xf] 0
        $region72: #{tpu_custom_call.1} parent=47 // pred_fallthru
          _
        %v654 = vld [vmem:[#allocation2] sm:$0x8]
        %v655 = vld [vmem:[#allocation2 + $0x4] sm:$0xf]
        %v656 = vld [vmem:[#allocation2 + $0x8] sm:$0xf]
        %v657 = vld [vmem:[#allocation2 + $0x10] sm:$0x8]
        %v658 = vld [vmem:[#allocation2 + $0x14] sm:$0xf]
        %v659 = vld [vmem:[#allocation2 + $0x18] sm:$0xf]
        %v660 = vld [vmem:[#allocation2 + $0x20] sm:$0x8]
        %v661 = vld [vmem:[#allocation2 + $0x24] sm:$0xf]
        %v662 = vld [vmem:[#allocation2 + $0x28] sm:$0xf]
        %v663 = vld [vmem:[#allocation2 + $0x30] sm:$0x8]
        %v664 = vld [vmem:[#allocation2 + $0x34] sm:$0xf]
        %v665 = vld [vmem:[#allocation2 + $0x38] sm:$0xf]
        %v666 = vld [vmem:[#allocation2 + $0x40] sm:$0x8]
        %v667 = vld [vmem:[#allocation2 + $0x44] sm:$0xf]
        %v668 = vld [vmem:[#allocation2 + $0x48] sm:$0xf]
        %v669 = vld [vmem:[#allocation2 + $0x50] sm:$0x8]
        %v670 = vld [vmem:[#allocation2 + $0x54] sm:$0xf]
        %v671 = vld [vmem:[#allocation2 + $0x58] sm:$0xf]
        %v672 = vld [vmem:[#allocation2 + $0x60] sm:$0x8]
        %v673 = vld [vmem:[#allocation2 + $0x64] sm:$0xf]
        %v674 = vld [vmem:[#allocation2 + $0x68] sm:$0xf]
        %v675 = vld [vmem:[#allocation2 + $0x70] sm:$0x8]
        %v676 = vld [vmem:[#allocation2 + $0x74] sm:$0xf]
        %v677 = vld [vmem:[#allocation2 + $0x78] sm:$0xf]
        %v678 = vld [vmem:[#allocation2 + $0x80] sm:$0x8]
        %v679 = vld [vmem:[#allocation2 + $0x84] sm:$0xf]
        %v680 = vld [vmem:[#allocation2 + $0x88] sm:$0xf]
        %v681 = vld [vmem:[#allocation2 + $0x90] sm:$0x8]
        %v682 = vld [vmem:[#allocation2 + $0x94] sm:$0xf]
        %v683 = vld [vmem:[#allocation2 + $0x98] sm:$0xf]
        %vm684 = vsmask.f32 256
        %vm685 = vsmask.f32 4368
        %vm686 = vmor %vm684, %vm685
        %v688 = vshrl.u32 %v654, 16
        %v690 = vrot.slane %v688, 7
        %v691 = vrot.slane %v690, 4
        %v693 = vshrl.u32 %v655, 16
        %v695 = vrot.slane %v693, 7
        %v696 = vshll.u32 %v655, 16
        %v698 = vor.u32 %v695, %v696
        %v699 = vsel %vm686, %v691, %v698
        %v700 = vrot.slane %v695, 4
        %v702 = vshrl.u32 %v656, 16
        %v704 = vrot.slane %v702, 7
        %v705 = vshll.u32 %v656, 16
        %v707 = vor.u32 %v704, %v705
        %v708 = vsel %vm686, %v700, %v707
        %v710 = vshrl.u32 %v657, 16
        %v712 = vrot.slane %v710, 7
        %v713 = vrot.slane %v712, 4
        %v715 = vshrl.u32 %v658, 16
        %v717 = vrot.slane %v715, 7
        %v718 = vshll.u32 %v658, 16
        %v720 = vor.u32 %v717, %v718
        %v721 = vsel %vm686, %v713, %v720
        %v722 = vrot.slane %v717, 4
        %v724 = vshrl.u32 %v659, 16
        %v726 = vrot.slane %v724, 7
        %v727 = vshll.u32 %v659, 16
        %v729 = vor.u32 %v726, %v727
        %v730 = vsel %vm686, %v722, %v729
        %v732 = vshrl.u32 %v660, 16
        %v734 = vrot.slane %v732, 7
        %v735 = vrot.slane %v734, 4
        %v737 = vshrl.u32 %v661, 16
        %v739 = vrot.slane %v737, 7
        %v740 = vshll.u32 %v661, 16
        %v742 = vor.u32 %v739, %v740
        %v743 = vsel %vm686, %v735, %v742
        %v744 = vrot.slane %v739, 4
        %v746 = vshrl.u32 %v662, 16
        %v748 = vrot.slane %v746, 7
        %v749 = vshll.u32 %v662, 16
        %v751 = vor.u32 %v748, %v749
        %v752 = vsel %vm686, %v744, %v751
        %v754 = vshrl.u32 %v663, 16
        %v756 = vrot.slane %v754, 7
        %v757 = vrot.slane %v756, 4
        %v759 = vshrl.u32 %v664, 16
        %v761 = vrot.slane %v759, 7
        %v762 = vshll.u32 %v664, 16
        %v764 = vor.u32 %v761, %v762
        %v765 = vsel %vm686, %v757, %v764
        %v766 = vrot.slane %v761, 4
        %v768 = vshrl.u32 %v665, 16
        %v770 = vrot.slane %v768, 7
        %v771 = vshll.u32 %v665, 16
        %v773 = vor.u32 %v770, %v771
        %v774 = vsel %vm686, %v766, %v773
        %v776 = vshrl.u32 %v666, 16
        %v778 = vrot.slane %v776, 7
        %v779 = vrot.slane %v778, 4
        %v781 = vshrl.u32 %v667, 16
        %v783 = vrot.slane %v781, 7
        %v784 = vshll.u32 %v667, 16
        %v786 = vor.u32 %v783, %v784
        %v787 = vsel %vm686, %v779, %v786
        %v788 = vrot.slane %v783, 4
        %v790 = vshrl.u32 %v668, 16
        %v792 = vrot.slane %v790, 7
        %v793 = vshll.u32 %v668, 16
        %v795 = vor.u32 %v792, %v793
        %v796 = vsel %vm686, %v788, %v795
        %v798 = vshrl.u32 %v669, 16
        %v800 = vrot.slane %v798, 7
        %v801 = vrot.slane %v800, 4
        %v803 = vshrl.u32 %v670, 16
        %v805 = vrot.slane %v803, 7
        %v806 = vshll.u32 %v670, 16
        %v808 = vor.u32 %v805, %v806
        %v809 = vsel %vm686, %v801, %v808
        %v810 = vrot.slane %v805, 4
        %v812 = vshrl.u32 %v671, 16
        %v814 = vrot.slane %v812, 7
        %v815 = vshll.u32 %v671, 16
        %v817 = vor.u32 %v814, %v815
        %v818 = vsel %vm686, %v810, %v817
        %v820 = vshrl.u32 %v672, 16
        %v822 = vrot.slane %v820, 7
        %v823 = vrot.slane %v822, 4
        %v825 = vshrl.u32 %v673, 16
        %v827 = vrot.slane %v825, 7
        %v828 = vshll.u32 %v673, 16
        %v830 = vor.u32 %v827, %v828
        %v831 = vsel %vm686, %v823, %v830
        %v832 = vrot.slane %v827, 4
        %v834 = vshrl.u32 %v674, 16
        %v836 = vrot.slane %v834, 7
        %v837 = vshll.u32 %v674, 16
        %v839 = vor.u32 %v836, %v837
        %v840 = vsel %vm686, %v832, %v839
        %v842 = vshrl.u32 %v675, 16
        %v844 = vrot.slane %v842, 7
        %v845 = vrot.slane %v844, 4
        %v847 = vshrl.u32 %v676, 16
        %v849 = vrot.slane %v847, 7
        %v850 = vshll.u32 %v676, 16
        %v852 = vor.u32 %v849, %v850
        %v853 = vsel %vm686, %v845, %v852
        %v854 = vrot.slane %v849, 4
        %v856 = vshrl.u32 %v677, 16
        %v858 = vrot.slane %v856, 7
        %v859 = vshll.u32 %v677, 16
        %v861 = vor.u32 %v858, %v859
        %v862 = vsel %vm686, %v854, %v861
        %v863 = vld [vmem:[#allocation8] sm:$0xf]
        %v864 = vld [vmem:[#allocation8 + $0x4] sm:$0xf]
        %v865 = vld [vmem:[#allocation8 + $0x8] sm:$0xf]
        %v866 = vld [vmem:[#allocation8 + $0xc] sm:$0xf]
        %v867 = vld [vmem:[#allocation8 + $0x10] sm:$0xf]
        %v868 = vld [vmem:[#allocation8 + $0x14] sm:$0xf]
        %v869 = vld [vmem:[#allocation8 + $0x18] sm:$0xf]
        %v870 = vld [vmem:[#allocation8 + $0x1c] sm:$0xf]
        %v871 = vld [vmem:[#allocation8 + $0x20] sm:$0xf]
        %v872 = vld [vmem:[#allocation8 + $0x24] sm:$0xf]
        %v873 = vld [vmem:[#allocation8 + $0x28] sm:$0xf]
        %v874 = vld [vmem:[#allocation8 + $0x2c] sm:$0xf]
        %v875 = vld [vmem:[#allocation8 + $0x30] sm:$0xf]
        %v876 = vld [vmem:[#allocation8 + $0x34] sm:$0xf]
        %v877 = vld [vmem:[#allocation8 + $0x38] sm:$0xf]
        %v878 = vld [vmem:[#allocation8 + $0x3c] sm:$0xf]
        %v880 = vshrl.u32 %v678, 16
        %v882 = vrot.slane %v880, 7
        %v883 = vrot.slane %v882, 4
        %v885 = vshrl.u32 %v679, 16
        %v887 = vrot.slane %v885, 7
        %v888 = vshll.u32 %v679, 16
        %v890 = vor.u32 %v887, %v888
        %v891 = vsel %vm686, %v883, %v890
        %v892 = vrot.slane %v887, 4
        %v894 = vshrl.u32 %v680, 16
        %v896 = vrot.slane %v894, 7
        %v897 = vshll.u32 %v680, 16
        %v899 = vor.u32 %v896, %v897
        %v900 = vsel %vm686, %v892, %v899
        %s901 = scalar_lea.vmem [#allocation8], 192
        %v902 = vld [vmem:[%s901] sm:$0xf]
        %v903 = vld [vmem:[%s901 + $0x4] sm:$0xf]
        %v904 = vld [vmem:[%s901 + $0x8] sm:$0xf]
        %v905 = vld [vmem:[%s901 + $0xc] sm:$0xf]
        %v906 = vld [vmem:[%s901 + $0x10] sm:$0xf]
        %v907 = vld [vmem:[%s901 + $0x14] sm:$0xf]
        %v908 = vld [vmem:[%s901 + $0x18] sm:$0xf]
        %v909 = vld [vmem:[%s901 + $0x1c] sm:$0xf]
        %v910 = vld [vmem:[%s901 + $0x20] sm:$0xf]
        %v911 = vld [vmem:[%s901 + $0x24] sm:$0xf]
        %v912 = vld [vmem:[%s901 + $0x28] sm:$0xf]
        %v913 = vld [vmem:[%s901 + $0x2c] sm:$0xf]
        %v914 = vld [vmem:[%s901 + $0x30] sm:$0xf]
        %v915 = vld [vmem:[%s901 + $0x34] sm:$0xf]
        %v916 = vld [vmem:[%s901 + $0x38] sm:$0xf]
        %v917 = vld [vmem:[%s901 + $0x3c] sm:$0xf]
        %v918 = vunpack.c.l.b16 %v721
        %v919 = vunpack.c.l.b16 %v730
        %v920 = vunpack.c.l.b16 %v743
        %v921 = vunpack.c.l.b16 %v752
        %v922 = vunpack.c.l.b16 %v765
        %v923 = vunpack.c.l.b16 %v774
        %v924 = vunpack.c.l.b16 %v787
        %v925 = vunpack.c.l.b16 %v796
        %v926 = vunpack.c.l.b16 %v809
        %v927 = vunpack.c.l.b16 %v818
        %v928 = vunpack.c.l.b16 %v831
        %v929 = vunpack.c.l.b16 %v840
        %v930 = vunpack.c.l.b16 %v853
        %v931 = vunpack.c.l.b16 %v862
        %v932 = vunpack.c.l.b16 %v891
        %v933 = vunpack.c.l.b16 %v900
        %v934 = vpack.c.b16 %v919, %v918
        %v935 = vpack.c.b16 %v921, %v920
        %v936 = vpack.c.b16 %v923, %v922
        %v937 = vpack.c.b16 %v925, %v924
        %v938 = vpack.c.b16 %v927, %v926
        %v939 = vpack.c.b16 %v929, %v928
        %v940 = vpack.c.b16 %v931, %v930
        %v941 = vpack.c.b16 %v933, %v932
        %v966 = vunpack.c.l.b16 %v902
        %v967 = vunpack.c.l.b16 %v903
        %v968 = vunpack.c.l.b16 %v904
        %v969 = vunpack.c.l.b16 %v905
        %v970 = vunpack.c.l.b16 %v906
        %v971 = vunpack.c.l.b16 %v907
        %v972 = vunpack.c.l.b16 %v908
        %v973 = vunpack.c.l.b16 %v909
        %v974 = vunpack.c.l.b16 %v910
        %v975 = vunpack.c.l.b16 %v911
        %v976 = vunpack.c.l.b16 %v912
        %v977 = vunpack.c.l.b16 %v913
        %v978 = vunpack.c.l.b16 %v914
        %v979 = vunpack.c.l.b16 %v915
        %v980 = vunpack.c.l.b16 %v916
        %v981 = vunpack.c.l.b16 %v917
        %v982 = vpack.c.b16 %v967, %v966
        %v983 = vpack.c.b16 %v969, %v968
        %v984 = vpack.c.b16 %v971, %v970
        %v985 = vpack.c.b16 %v973, %v972
        %v986 = vpack.c.b16 %v975, %v974
        %v987 = vpack.c.b16 %v977, %v976
        %v988 = vpack.c.b16 %v979, %v978
        %v989 = vpack.c.b16 %v981, %v980
        %998 = vmatpush.bf16.msra.mxu0 %v989
        %999 = vmatpush.bf16.msra.mxu0 %v988
        %1000 = vmatpush.bf16.msra.mxu0 %v987
        %1001 = vmatpush.bf16.msra.mxu0 %v986
        %1002 = vmatpush.bf16.msra.mxu0 %v985
        %1003 = vmatpush.bf16.msra.mxu0 %v984
        %1004 = vmatpush.bf16.msra.mxu0 %v983
        %1005 = vmatpush.bf16.msra.mxu0 %v982
        %1006 = vmatmul.bf16.gmra.mxu0 %v934
        %v1007 = vpop.f32.mrf.mxu0
        %v1008 = vadd.f32 0.0, %v1007
        %v1009 = vpop.f32.mrf.mxu0
        %v1010 = vadd.f32 0.0, %v1009
        %1011 = vmatmul.bf16.gmra.mxu0 %v935
        %v1012 = vpop.f32.mrf.mxu0
        %v1013 = vadd.f32 0.0, %v1012
        %v1014 = vpop.f32.mrf.mxu0
        %v1015 = vadd.f32 0.0, %v1014
        %1016 = vmatmul.bf16.gmra.mxu0 %v936
        %v1017 = vpop.f32.mrf.mxu0
        %v1018 = vadd.f32 0.0, %v1017
        %v1019 = vpop.f32.mrf.mxu0
        %v1020 = vadd.f32 0.0, %v1019
        %1021 = vmatmul.bf16.gmra.mxu0 %v937
        %v1022 = vpop.f32.mrf.mxu0
        %v1023 = vadd.f32 0.0, %v1022
        %v1024 = vpop.f32.mrf.mxu0
        %v1025 = vadd.f32 0.0, %v1024
        %1026 = vmatmul.bf16.gmra.mxu0 %v938
        %v1027 = vpop.f32.mrf.mxu0
        %v1028 = vadd.f32 0.0, %v1027
        %v1029 = vpop.f32.mrf.mxu0
        %v1030 = vadd.f32 0.0, %v1029
        %1031 = vmatmul.bf16.gmra.mxu0 %v939
        %v1032 = vpop.f32.mrf.mxu0
        %v1033 = vadd.f32 0.0, %v1032
        %v1034 = vpop.f32.mrf.mxu0
        %v1035 = vadd.f32 0.0, %v1034
        %1036 = vmatmul.bf16.gmra.mxu0 %v940
        %v1037 = vpop.f32.mrf.mxu0
        %v1038 = vadd.f32 0.0, %v1037
        %v1039 = vpop.f32.mrf.mxu0
        %v1040 = vadd.f32 0.0, %v1039
        %1041 = vmatmul.bf16.gmra.mxu0 %v941
        %v1042 = vpop.f32.mrf.mxu0
        %v1043 = vadd.f32 0.0, %v1042
        %v1044 = vpop.f32.mrf.mxu0
        %v1045 = vadd.f32 0.0, %v1044
        %1046 = vdwg.mxu0
        %v1047 = vunpack.c.l.b16 %v699
        %v1048 = vunpack.c.l.b16 %v708
        %v1049 = vpack.c.b16 %v1048, %v1047
        %v1067 = vunpack.c.l.b16 %v863
        %v1068 = vunpack.c.l.b16 %v864
        %v1069 = vunpack.c.l.b16 %v865
        %v1070 = vunpack.c.l.b16 %v866
        %v1071 = vunpack.c.l.b16 %v867
        %v1072 = vunpack.c.l.b16 %v868
        %v1073 = vunpack.c.l.b16 %v869
        %v1074 = vunpack.c.l.b16 %v870
        %v1075 = vunpack.c.l.b16 %v871
        %v1076 = vunpack.c.l.b16 %v872
        %v1077 = vunpack.c.l.b16 %v873
        %v1078 = vunpack.c.l.b16 %v874
        %v1079 = vunpack.c.l.b16 %v875
        %v1080 = vunpack.c.l.b16 %v876
        %v1081 = vunpack.c.l.b16 %v877
        %v1082 = vunpack.c.l.b16 %v878
        %v1083 = vpack.c.b16 %v1068, %v1067
        %v1084 = vpack.c.b16 %v1070, %v1069
        %v1085 = vpack.c.b16 %v1072, %v1071
        %v1086 = vpack.c.b16 %v1074, %v1073
        %v1087 = vpack.c.b16 %v1076, %v1075
        %v1088 = vpack.c.b16 %v1078, %v1077
        %v1089 = vpack.c.b16 %v1080, %v1079
        %v1090 = vpack.c.b16 %v1082, %v1081
        %1099 = vmatpush.bf16.msra.mxu0 %v1090
        %1100 = vmatpush.bf16.msra.mxu0 %v1089
        %1101 = vmatpush.bf16.msra.mxu0 %v1088
        %1102 = vmatpush.bf16.msra.mxu0 %v1087
        %1103 = vmatpush.bf16.msra.mxu0 %v1086
        %1104 = vmatpush.bf16.msra.mxu0 %v1085
        %1105 = vmatpush.bf16.msra.mxu0 %v1084
        %1106 = vmatpush.bf16.msra.mxu0 %v1083
        %1107 = vmatmul.bf16.gmra.mxu0 %v1049
        %v1108 = vpop.f32.mrf.mxu0
        %v1109 = vadd.f32 %v1008, %v1108
        %v1110 = vpop.f32.mrf.mxu0
        %v1111 = vadd.f32 %v1010, %v1110
        %1112 = vmatmul.bf16.gmra.mxu0 %v934
        %v1113 = vpop.f32.mrf.mxu0
        %v1114 = vadd.f32 %v1013, %v1113
        %v1115 = vpop.f32.mrf.mxu0
        %v1116 = vadd.f32 %v1015, %v1115
        %1117 = vmatmul.bf16.gmra.mxu0 %v935
        %v1118 = vpop.f32.mrf.mxu0
        %v1119 = vadd.f32 %v1018, %v1118
        %v1120 = vpop.f32.mrf.mxu0
        %v1121 = vadd.f32 %v1020, %v1120
        %1122 = vmatmul.bf16.gmra.mxu0 %v936
        %v1123 = vpop.f32.mrf.mxu0
        %v1124 = vadd.f32 %v1023, %v1123
        %v1125 = vpop.f32.mrf.mxu0
        %v1126 = vadd.f32 %v1025, %v1125
        %1127 = vmatmul.bf16.gmra.mxu0 %v937
        %v1128 = vpop.f32.mrf.mxu0
        %v1129 = vadd.f32 %v1028, %v1128
        %v1130 = vpop.f32.mrf.mxu0
        %v1131 = vadd.f32 %v1030, %v1130
        %1132 = vmatmul.bf16.gmra.mxu0 %v938
        %v1133 = vpop.f32.mrf.mxu0
        %v1134 = vadd.f32 %v1033, %v1133
        %v1135 = vpop.f32.mrf.mxu0
        %v1136 = vadd.f32 %v1035, %v1135
        %1137 = vmatmul.bf16.gmra.mxu0 %v939
        %v1138 = vpop.f32.mrf.mxu0
        %v1139 = vadd.f32 %v1038, %v1138
        %v1140 = vpop.f32.mrf.mxu0
        %v1141 = vadd.f32 %v1040, %v1140
        %1142 = vmatmul.bf16.gmra.mxu0 %v940
        %v1143 = vpop.f32.mrf.mxu0
        %v1144 = vadd.f32 %v1043, %v1143
        %v1145 = vpop.f32.mrf.mxu0
        %v1146 = vadd.f32 %v1045, %v1145
        %1147 = vdwg.mxu0
        %v1149 = vshrl.u32 %v681, 16
        %v1151 = vrot.slane %v1149, 7
        %v1152 = vrot.slane %v1151, 4
        %v1154 = vshrl.u32 %v682, 16
        %v1156 = vrot.slane %v1154, 7
        %v1157 = vshll.u32 %v682, 16
        %v1159 = vor.u32 %v1156, %v1157
        %v1160 = vsel %vm686, %v1152, %v1159
        %v1161 = vrot.slane %v1156, 4
        %v1163 = vshrl.u32 %v683, 16
        %v1165 = vrot.slane %v1163, 7
        %v1166 = vshll.u32 %v683, 16
        %v1168 = vor.u32 %v1165, %v1166
        %v1169 = vsel %vm686, %v1161, %v1168
        %s1170 = scalar_lea.vmem [#allocation8], 384
        %v1171 = vld [vmem:[%s1170] sm:$0xf]
        %v1172 = vld [vmem:[%s1170 + $0x4] sm:$0xf]
        %v1173 = vld [vmem:[%s1170 + $0x8] sm:$0xf]
        %v1174 = vld [vmem:[%s1170 + $0xc] sm:$0xf]
        %v1175 = vld [vmem:[%s1170 + $0x10] sm:$0xf]
        %v1176 = vld [vmem:[%s1170 + $0x14] sm:$0xf]
        %v1177 = vld [vmem:[%s1170 + $0x18] sm:$0xf]
        %v1178 = vld [vmem:[%s1170 + $0x1c] sm:$0xf]
        %v1179 = vld [vmem:[%s1170 + $0x20] sm:$0xf]
        %v1180 = vld [vmem:[%s1170 + $0x24] sm:$0xf]
        %v1181 = vld [vmem:[%s1170 + $0x28] sm:$0xf]
        %v1182 = vld [vmem:[%s1170 + $0x2c] sm:$0xf]
        %v1183 = vld [vmem:[%s1170 + $0x30] sm:$0xf]
        %v1184 = vld [vmem:[%s1170 + $0x34] sm:$0xf]
        %v1185 = vld [vmem:[%s1170 + $0x38] sm:$0xf]
        %v1186 = vld [vmem:[%s1170 + $0x3c] sm:$0xf]
        %v1187 = vunpack.c.l.b16 %v1160
        %v1188 = vunpack.c.l.b16 %v1169
        %v1189 = vpack.c.b16 %v1188, %v1187
        %v1207 = vunpack.c.l.b16 %v1171
        %v1208 = vunpack.c.l.b16 %v1172
        %v1209 = vunpack.c.l.b16 %v1173
        %v1210 = vunpack.c.l.b16 %v1174
        %v1211 = vunpack.c.l.b16 %v1175
        %v1212 = vunpack.c.l.b16 %v1176
        %v1213 = vunpack.c.l.b16 %v1177
        %v1214 = vunpack.c.l.b16 %v1178
        %v1215 = vunpack.c.l.b16 %v1179
        %v1216 = vunpack.c.l.b16 %v1180
        %v1217 = vunpack.c.l.b16 %v1181
        %v1218 = vunpack.c.l.b16 %v1182
        %v1219 = vunpack.c.l.b16 %v1183
        %v1220 = vunpack.c.l.b16 %v1184
        %v1221 = vunpack.c.l.b16 %v1185
        %v1222 = vunpack.c.l.b16 %v1186
        %v1223 = vpack.c.b16 %v1208, %v1207
        %v1224 = vpack.c.b16 %v1210, %v1209
        %v1225 = vpack.c.b16 %v1212, %v1211
        %v1226 = vpack.c.b16 %v1214, %v1213
        %v1227 = vpack.c.b16 %v1216, %v1215
        %v1228 = vpack.c.b16 %v1218, %v1217
        %v1229 = vpack.c.b16 %v1220, %v1219
        %v1230 = vpack.c.b16 %v1222, %v1221
        %1239 = vmatpush.bf16.msra.mxu0 %v1230
        %1240 = vmatpush.bf16.msra.mxu0 %v1229
        %1241 = vmatpush.bf16.msra.mxu0 %v1228
        %1242 = vmatpush.bf16.msra.mxu0 %v1227
        %1243 = vmatpush.bf16.msra.mxu0 %v1226
        %1244 = vmatpush.bf16.msra.mxu0 %v1225
        %1245 = vmatpush.bf16.msra.mxu0 %v1224
        %1246 = vmatpush.bf16.msra.mxu0 %v1223
        %1247 = vmatmul.bf16.gmra.mxu0 %v935
        %v1248 = vpop.f32.mrf.mxu0
        %v1249 = vadd.f32 0.0, %v1248
        %v1250 = vpop.f32.mrf.mxu0
        %v1251 = vadd.f32 0.0, %v1250
        %1252 = vmatmul.bf16.gmra.mxu0 %v936
        %v1253 = vpop.f32.mrf.mxu0
        %v1254 = vadd.f32 0.0, %v1253
        %v1255 = vpop.f32.mrf.mxu0
        %v1256 = vadd.f32 0.0, %v1255
        %1257 = vmatmul.bf16.gmra.mxu0 %v937
        %v1258 = vpop.f32.mrf.mxu0
        %v1259 = vadd.f32 0.0, %v1258
        %v1260 = vpop.f32.mrf.mxu0
        %v1261 = vadd.f32 0.0, %v1260
        %1262 = vmatmul.bf16.gmra.mxu0 %v938
        %v1263 = vpop.f32.mrf.mxu0
        %v1264 = vadd.f32 0.0, %v1263
        %v1265 = vpop.f32.mrf.mxu0
        %v1266 = vadd.f32 0.0, %v1265
        %1267 = vmatmul.bf16.gmra.mxu0 %v939
        %v1268 = vpop.f32.mrf.mxu0
        %v1269 = vadd.f32 0.0, %v1268
        %v1270 = vpop.f32.mrf.mxu0
        %v1271 = vadd.f32 0.0, %v1270
        %1272 = vmatmul.bf16.gmra.mxu0 %v940
        %v1273 = vpop.f32.mrf.mxu0
        %v1274 = vadd.f32 0.0, %v1273
        %v1275 = vpop.f32.mrf.mxu0
        %v1276 = vadd.f32 0.0, %v1275
        %1277 = vmatmul.bf16.gmra.mxu0 %v941
        %v1278 = vpop.f32.mrf.mxu0
        %v1279 = vadd.f32 0.0, %v1278
        %v1280 = vpop.f32.mrf.mxu0
        %v1281 = vadd.f32 0.0, %v1280
        %1282 = vmatmul.bf16.gmra.mxu0 %v1189
        %v1283 = vpop.f32.mrf.mxu0
        %v1284 = vadd.f32 0.0, %v1283
        %v1285 = vpop.f32.mrf.mxu0
        %v1286 = vadd.f32 0.0, %v1285
        %1287 = vdwg.mxu0
        %v1288 = vadd.f32 %v1109, %v1249
        %v1289 = vadd.f32 %v1111, %v1251
        %v1290 = vadd.f32 %v1114, %v1254
        %v1291 = vadd.f32 %v1116, %v1256
        %v1292 = vadd.f32 %v1119, %v1259
        %v1293 = vadd.f32 %v1121, %v1261
        %v1294 = vadd.f32 %v1124, %v1264
        %v1295 = vadd.f32 %v1126, %v1266
        %v1296 = vadd.f32 %v1129, %v1269
        %v1297 = vadd.f32 %v1131, %v1271
        %v1298 = vadd.f32 %v1134, %v1274
        %v1299 = vadd.f32 %v1136, %v1276
        %v1300 = vadd.f32 %v1139, %v1279
        %v1301 = vadd.f32 %v1141, %v1281
        %v1302 = vadd.f32 %v1144, %v1284
        %v1303 = vadd.f32 %v1146, %v1286
        %s1304 = scalar_lea.vmem [#allocation8], 64
        %v1305 = vld [vmem:[%s1304] sm:$0xf]
        %v1306 = vld [vmem:[%s1304 + $0x4] sm:$0xf]
        %v1307 = vld [vmem:[%s1304 + $0x8] sm:$0xf]
        %v1308 = vld [vmem:[%s1304 + $0xc] sm:$0xf]
        %v1309 = vld [vmem:[%s1304 + $0x10] sm:$0xf]
        %v1310 = vld [vmem:[%s1304 + $0x14] sm:$0xf]
        %v1311 = vld [vmem:[%s1304 + $0x18] sm:$0xf]
        %v1312 = vld [vmem:[%s1304 + $0x1c] sm:$0xf]
        %v1313 = vld [vmem:[%s1304 + $0x20] sm:$0xf]
        %v1314 = vld [vmem:[%s1304 + $0x24] sm:$0xf]
        %v1315 = vld [vmem:[%s1304 + $0x28] sm:$0xf]
        %v1316 = vld [vmem:[%s1304 + $0x2c] sm:$0xf]
        %v1317 = vld [vmem:[%s1304 + $0x30] sm:$0xf]
        %v1318 = vld [vmem:[%s1304 + $0x34] sm:$0xf]
        %v1319 = vld [vmem:[%s1304 + $0x38] sm:$0xf]
        %v1320 = vld [vmem:[%s1304 + $0x3c] sm:$0xf]
        %v1337 = vunpack.c.l.b16 %v655
        %v1338 = vunpack.c.l.b16 %v656
        %v1339 = vunpack.c.l.b16 %v658
        %v1340 = vunpack.c.l.b16 %v659
        %v1341 = vunpack.c.l.b16 %v661
        %v1342 = vunpack.c.l.b16 %v662
        %v1343 = vunpack.c.l.b16 %v664
        %v1344 = vunpack.c.l.b16 %v665
        %v1345 = vunpack.c.l.b16 %v667
        %v1346 = vunpack.c.l.b16 %v668
        %v1347 = vunpack.c.l.b16 %v670
        %v1348 = vunpack.c.l.b16 %v671
        %v1349 = vunpack.c.l.b16 %v673
        %v1350 = vunpack.c.l.b16 %v674
        %v1351 = vunpack.c.l.b16 %v676
        %v1352 = vunpack.c.l.b16 %v677
        %v1353 = vpack.c.b16 %v1338, %v1337
        %v1354 = vpack.c.b16 %v1340, %v1339
        %v1355 = vpack.c.b16 %v1342, %v1341
        %v1356 = vpack.c.b16 %v1344, %v1343
        %v1357 = vpack.c.b16 %v1346, %v1345
        %v1358 = vpack.c.b16 %v1348, %v1347
        %v1359 = vpack.c.b16 %v1350, %v1349
        %v1360 = vpack.c.b16 %v1352, %v1351
        %v1385 = vunpack.c.l.b16 %v1305
        %v1386 = vunpack.c.l.b16 %v1306
        %v1387 = vunpack.c.l.b16 %v1307
        %v1388 = vunpack.c.l.b16 %v1308
        %v1389 = vunpack.c.l.b16 %v1309
        %v1390 = vunpack.c.l.b16 %v1310
        %v1391 = vunpack.c.l.b16 %v1311
        %v1392 = vunpack.c.l.b16 %v1312
        %v1393 = vunpack.c.l.b16 %v1313
        %v1394 = vunpack.c.l.b16 %v1314
        %v1395 = vunpack.c.l.b16 %v1315
        %v1396 = vunpack.c.l.b16 %v1316
        %v1397 = vunpack.c.l.b16 %v1317
        %v1398 = vunpack.c.l.b16 %v1318
        %v1399 = vunpack.c.l.b16 %v1319
        %v1400 = vunpack.c.l.b16 %v1320
        %v1401 = vpack.c.b16 %v1386, %v1385
        %v1402 = vpack.c.b16 %v1388, %v1387
        %v1403 = vpack.c.b16 %v1390, %v1389
        %v1404 = vpack.c.b16 %v1392, %v1391
        %v1405 = vpack.c.b16 %v1394, %v1393
        %v1406 = vpack.c.b16 %v1396, %v1395
        %v1407 = vpack.c.b16 %v1398, %v1397
        %v1408 = vpack.c.b16 %v1400, %v1399
        %1417 = vmatpush.bf16.msra.mxu0 %v1408
        %1418 = vmatpush.bf16.msra.mxu0 %v1407
        %1419 = vmatpush.bf16.msra.mxu0 %v1406
        %1420 = vmatpush.bf16.msra.mxu0 %v1405
        %1421 = vmatpush.bf16.msra.mxu0 %v1404
        %1422 = vmatpush.bf16.msra.mxu0 %v1403
        %1423 = vmatpush.bf16.msra.mxu0 %v1402
        %1424 = vmatpush.bf16.msra.mxu0 %v1401
        %1425 = vmatmul.bf16.gmra.mxu0 %v1353
        %v1426 = vpop.f32.mrf.mxu0
        %v1427 = vadd.f32 0.0, %v1426
        %v1428 = vpop.f32.mrf.mxu0
        %v1429 = vadd.f32 0.0, %v1428
        %1430 = vmatmul.bf16.gmra.mxu0 %v1354
        %v1431 = vpop.f32.mrf.mxu0
        %v1432 = vadd.f32 0.0, %v1431
        %v1433 = vpop.f32.mrf.mxu0
        %v1434 = vadd.f32 0.0, %v1433
        %1435 = vmatmul.bf16.gmra.mxu0 %v1355
        %v1436 = vpop.f32.mrf.mxu0
        %v1437 = vadd.f32 0.0, %v1436
        %v1438 = vpop.f32.mrf.mxu0
        %v1439 = vadd.f32 0.0, %v1438
        %1440 = vmatmul.bf16.gmra.mxu0 %v1356
        %v1441 = vpop.f32.mrf.mxu0
        %v1442 = vadd.f32 0.0, %v1441
        %v1443 = vpop.f32.mrf.mxu0
        %v1444 = vadd.f32 0.0, %v1443
        %1445 = vmatmul.bf16.gmra.mxu0 %v1357
        %v1446 = vpop.f32.mrf.mxu0
        %v1447 = vadd.f32 0.0, %v1446
        %v1448 = vpop.f32.mrf.mxu0
        %v1449 = vadd.f32 0.0, %v1448
        %1450 = vmatmul.bf16.gmra.mxu0 %v1358
        %v1451 = vpop.f32.mrf.mxu0
        %v1452 = vadd.f32 0.0, %v1451
        %v1453 = vpop.f32.mrf.mxu0
        %v1454 = vadd.f32 0.0, %v1453
        %1455 = vmatmul.bf16.gmra.mxu0 %v1359
        %v1456 = vpop.f32.mrf.mxu0
        %v1457 = vadd.f32 0.0, %v1456
        %v1458 = vpop.f32.mrf.mxu0
        %v1459 = vadd.f32 0.0, %v1458
        %1460 = vmatmul.bf16.gmra.mxu0 %v1360
        %v1461 = vpop.f32.mrf.mxu0
        %v1462 = vadd.f32 0.0, %v1461
        %v1463 = vpop.f32.mrf.mxu0
        %v1464 = vadd.f32 0.0, %v1463
        %1465 = vdwg.mxu0
        %v1466 = vadd.f32 %v1288, %v1427
        %v1467 = vadd.f32 %v1289, %v1429
        %v1468 = vadd.f32 %v1290, %v1432
        %v1469 = vadd.f32 %v1291, %v1434
        %v1470 = vadd.f32 %v1292, %v1437
        %v1471 = vadd.f32 %v1293, %v1439
        %v1472 = vadd.f32 %v1294, %v1442
        %v1473 = vadd.f32 %v1295, %v1444
        %v1474 = vadd.f32 %v1296, %v1447
        %v1475 = vadd.f32 %v1297, %v1449
        %v1476 = vadd.f32 %v1298, %v1452
        %v1477 = vadd.f32 %v1299, %v1454
        %v1478 = vadd.f32 %v1300, %v1457
        %v1479 = vadd.f32 %v1301, %v1459
        %v1480 = vadd.f32 %v1302, %v1462
        %v1481 = vadd.f32 %v1303, %v1464
        %s1482 = scalar_lea.vmem [#allocation8], 256
        %v1483 = vld [vmem:[%s1482] sm:$0xf]
        %v1484 = vld [vmem:[%s1482 + $0x4] sm:$0xf]
        %v1485 = vld [vmem:[%s1482 + $0x8] sm:$0xf]
        %v1486 = vld [vmem:[%s1482 + $0xc] sm:$0xf]
        %v1487 = vld [vmem:[%s1482 + $0x10] sm:$0xf]
        %v1488 = vld [vmem:[%s1482 + $0x14] sm:$0xf]
        %v1489 = vld [vmem:[%s1482 + $0x18] sm:$0xf]
        %v1490 = vld [vmem:[%s1482 + $0x1c] sm:$0xf]
        %v1491 = vld [vmem:[%s1482 + $0x20] sm:$0xf]
        %v1492 = vld [vmem:[%s1482 + $0x24] sm:$0xf]
        %v1493 = vld [vmem:[%s1482 + $0x28] sm:$0xf]
        %v1494 = vld [vmem:[%s1482 + $0x2c] sm:$0xf]
        %v1495 = vld [vmem:[%s1482 + $0x30] sm:$0xf]
        %v1496 = vld [vmem:[%s1482 + $0x34] sm:$0xf]
        %v1497 = vld [vmem:[%s1482 + $0x38] sm:$0xf]
        %v1498 = vld [vmem:[%s1482 + $0x3c] sm:$0xf]
        %v1501 = vunpack.c.l.b16 %v679
        %v1502 = vunpack.c.l.b16 %v680
        %v1503 = vpack.c.b16 %v1502, %v1501
        %v1521 = vunpack.c.l.b16 %v1483
        %v1522 = vunpack.c.l.b16 %v1484
        %v1523 = vunpack.c.l.b16 %v1485
        %v1524 = vunpack.c.l.b16 %v1486
        %v1525 = vunpack.c.l.b16 %v1487
        %v1526 = vunpack.c.l.b16 %v1488
        %v1527 = vunpack.c.l.b16 %v1489
        %v1528 = vunpack.c.l.b16 %v1490
        %v1529 = vunpack.c.l.b16 %v1491
        %v1530 = vunpack.c.l.b16 %v1492
        %v1531 = vunpack.c.l.b16 %v1493
        %v1532 = vunpack.c.l.b16 %v1494
        %v1533 = vunpack.c.l.b16 %v1495
        %v1534 = vunpack.c.l.b16 %v1496
        %v1535 = vunpack.c.l.b16 %v1497
        %v1536 = vunpack.c.l.b16 %v1498
        %v1537 = vpack.c.b16 %v1522, %v1521
        %v1538 = vpack.c.b16 %v1524, %v1523
        %v1539 = vpack.c.b16 %v1526, %v1525
        %v1540 = vpack.c.b16 %v1528, %v1527
        %v1541 = vpack.c.b16 %v1530, %v1529
        %v1542 = vpack.c.b16 %v1532, %v1531
        %v1543 = vpack.c.b16 %v1534, %v1533
        %v1544 = vpack.c.b16 %v1536, %v1535
        %1553 = vmatpush.bf16.msra.mxu0 %v1544
        %1554 = vmatpush.bf16.msra.mxu0 %v1543
        %1555 = vmatpush.bf16.msra.mxu0 %v1542
        %1556 = vmatpush.bf16.msra.mxu0 %v1541
        %1557 = vmatpush.bf16.msra.mxu0 %v1540
        %1558 = vmatpush.bf16.msra.mxu0 %v1539
        %1559 = vmatpush.bf16.msra.mxu0 %v1538
        %1560 = vmatpush.bf16.msra.mxu0 %v1537
        %1561 = vmatmul.bf16.gmra.mxu0 %v1354
        %v1562 = vpop.f32.mrf.mxu0
        %v1563 = vadd.f32 0.0, %v1562
        %v1564 = vpop.f32.mrf.mxu0
        %v1565 = vadd.f32 0.0, %v1564
        %1566 = vmatmul.bf16.gmra.mxu0 %v1355
        %v1567 = vpop.f32.mrf.mxu0
        %v1568 = vadd.f32 0.0, %v1567
        %v1569 = vpop.f32.mrf.mxu0
        %v1570 = vadd.f32 0.0, %v1569
        %1571 = vmatmul.bf16.gmra.mxu0 %v1356
        %v1572 = vpop.f32.mrf.mxu0
        %v1573 = vadd.f32 0.0, %v1572
        %v1574 = vpop.f32.mrf.mxu0
        %v1575 = vadd.f32 0.0, %v1574
        %1576 = vmatmul.bf16.gmra.mxu0 %v1357
        %v1577 = vpop.f32.mrf.mxu0
        %v1578 = vadd.f32 0.0, %v1577
        %v1579 = vpop.f32.mrf.mxu0
        %v1580 = vadd.f32 0.0, %v1579
        %1581 = vmatmul.bf16.gmra.mxu0 %v1358
        %v1582 = vpop.f32.mrf.mxu0
        %v1583 = vadd.f32 0.0, %v1582
        %v1584 = vpop.f32.mrf.mxu0
        %v1585 = vadd.f32 0.0, %v1584
        %1586 = vmatmul.bf16.gmra.mxu0 %v1359
        %v1587 = vpop.f32.mrf.mxu0
        %v1588 = vadd.f32 0.0, %v1587
        %v1589 = vpop.f32.mrf.mxu0
        %v1590 = vadd.f32 0.0, %v1589
        %1591 = vmatmul.bf16.gmra.mxu0 %v1360
        %v1592 = vpop.f32.mrf.mxu0
        %v1593 = vadd.f32 0.0, %v1592
        %v1594 = vpop.f32.mrf.mxu0
        %v1595 = vadd.f32 0.0, %v1594
        %1596 = vmatmul.bf16.gmra.mxu0 %v1503
        %v1597 = vpop.f32.mrf.mxu0
        %v1598 = vadd.f32 0.0, %v1597
        %v1599 = vpop.f32.mrf.mxu0
        %v1600 = vadd.f32 0.0, %v1599
        %1601 = vdwg.mxu0
        %v1602 = vadd.f32 %v1466, %v1563
        %v1603 = vadd.f32 %v1467, %v1565
        %v1604 = vadd.f32 %v1468, %v1568
        %v1605 = vadd.f32 %v1469, %v1570
        %v1606 = vadd.f32 %v1470, %v1573
        %v1607 = vadd.f32 %v1471, %v1575
        %v1608 = vadd.f32 %v1472, %v1578
        %v1609 = vadd.f32 %v1473, %v1580
        %v1610 = vadd.f32 %v1474, %v1583
        %v1611 = vadd.f32 %v1475, %v1585
        %v1612 = vadd.f32 %v1476, %v1588
        %v1613 = vadd.f32 %v1477, %v1590
        %v1614 = vadd.f32 %v1478, %v1593
        %v1615 = vadd.f32 %v1479, %v1595
        %v1616 = vadd.f32 %v1480, %v1598
        %v1617 = vadd.f32 %v1481, %v1600
        %s1618 = scalar_lea.vmem [#allocation8], 448
        %v1619 = vld [vmem:[%s1618] sm:$0xf]
        %v1620 = vld [vmem:[%s1618 + $0x4] sm:$0xf]
        %v1621 = vld [vmem:[%s1618 + $0x8] sm:$0xf]
        %v1622 = vld [vmem:[%s1618 + $0xc] sm:$0xf]
        %v1623 = vld [vmem:[%s1618 + $0x10] sm:$0xf]
        %v1624 = vld [vmem:[%s1618 + $0x14] sm:$0xf]
        %v1625 = vld [vmem:[%s1618 + $0x18] sm:$0xf]
        %v1626 = vld [vmem:[%s1618 + $0x1c] sm:$0xf]
        %v1627 = vld [vmem:[%s1618 + $0x20] sm:$0xf]
        %v1628 = vld [vmem:[%s1618 + $0x24] sm:$0xf]
        %v1629 = vld [vmem:[%s1618 + $0x28] sm:$0xf]
        %v1630 = vld [vmem:[%s1618 + $0x2c] sm:$0xf]
        %v1631 = vld [vmem:[%s1618 + $0x30] sm:$0xf]
        %v1632 = vld [vmem:[%s1618 + $0x34] sm:$0xf]
        %v1633 = vld [vmem:[%s1618 + $0x38] sm:$0xf]
        %v1634 = vld [vmem:[%s1618 + $0x3c] sm:$0xf]
        %v1637 = vunpack.c.l.b16 %v682
        %v1638 = vunpack.c.l.b16 %v683
        %v1639 = vpack.c.b16 %v1638, %v1637
        %v1657 = vunpack.c.l.b16 %v1619
        %v1658 = vunpack.c.l.b16 %v1620
        %v1659 = vunpack.c.l.b16 %v1621
        %v1660 = vunpack.c.l.b16 %v1622
        %v1661 = vunpack.c.l.b16 %v1623
        %v1662 = vunpack.c.l.b16 %v1624
        %v1663 = vunpack.c.l.b16 %v1625
        %v1664 = vunpack.c.l.b16 %v1626
        %v1665 = vunpack.c.l.b16 %v1627
        %v1666 = vunpack.c.l.b16 %v1628
        %v1667 = vunpack.c.l.b16 %v1629
        %v1668 = vunpack.c.l.b16 %v1630
        %v1669 = vunpack.c.l.b16 %v1631
        %v1670 = vunpack.c.l.b16 %v1632
        %v1671 = vunpack.c.l.b16 %v1633
        %v1672 = vunpack.c.l.b16 %v1634
        %v1673 = vpack.c.b16 %v1658, %v1657
        %v1674 = vpack.c.b16 %v1660, %v1659
        %v1675 = vpack.c.b16 %v1662, %v1661
        %v1676 = vpack.c.b16 %v1664, %v1663
        %v1677 = vpack.c.b16 %v1666, %v1665
        %v1678 = vpack.c.b16 %v1668, %v1667
        %v1679 = vpack.c.b16 %v1670, %v1669
        %v1680 = vpack.c.b16 %v1672, %v1671
        %1689 = vmatpush.bf16.msra.mxu0 %v1680
        %1690 = vmatpush.bf16.msra.mxu0 %v1679
        %1691 = vmatpush.bf16.msra.mxu0 %v1678
        %1692 = vmatpush.bf16.msra.mxu0 %v1677
        %1693 = vmatpush.bf16.msra.mxu0 %v1676
        %1694 = vmatpush.bf16.msra.mxu0 %v1675
        %1695 = vmatpush.bf16.msra.mxu0 %v1674
        %1696 = vmatpush.bf16.msra.mxu0 %v1673
        %1697 = vmatmul.bf16.gmra.mxu0 %v1355
        %v1698 = vpop.f32.mrf.mxu0
        %v1699 = vadd.f32 0.0, %v1698
        %v1700 = vpop.f32.mrf.mxu0
        %v1701 = vadd.f32 0.0, %v1700
        %1702 = vmatmul.bf16.gmra.mxu0 %v1356
        %v1703 = vpop.f32.mrf.mxu0
        %v1704 = vadd.f32 0.0, %v1703
        %v1705 = vpop.f32.mrf.mxu0
        %v1706 = vadd.f32 0.0, %v1705
        %1707 = vmatmul.bf16.gmra.mxu0 %v1357
        %v1708 = vpop.f32.mrf.mxu0
        %v1709 = vadd.f32 0.0, %v1708
        %v1710 = vpop.f32.mrf.mxu0
        %v1711 = vadd.f32 0.0, %v1710
        %1712 = vmatmul.bf16.gmra.mxu0 %v1358
        %v1713 = vpop.f32.mrf.mxu0
        %v1714 = vadd.f32 0.0, %v1713
        %v1715 = vpop.f32.mrf.mxu0
        %v1716 = vadd.f32 0.0, %v1715
        %1717 = vmatmul.bf16.gmra.mxu0 %v1359
        %v1718 = vpop.f32.mrf.mxu0
        %v1719 = vadd.f32 0.0, %v1718
        %v1720 = vpop.f32.mrf.mxu0
        %v1721 = vadd.f32 0.0, %v1720
        %1722 = vmatmul.bf16.gmra.mxu0 %v1360
        %v1723 = vpop.f32.mrf.mxu0
        %v1724 = vadd.f32 0.0, %v1723
        %v1725 = vpop.f32.mrf.mxu0
        %v1726 = vadd.f32 0.0, %v1725
        %1727 = vmatmul.bf16.gmra.mxu0 %v1503
        %v1728 = vpop.f32.mrf.mxu0
        %v1729 = vadd.f32 0.0, %v1728
        %v1730 = vpop.f32.mrf.mxu0
        %v1731 = vadd.f32 0.0, %v1730
        %1732 = vmatmul.bf16.gmra.mxu0 %v1639
        %v1733 = vpop.f32.mrf.mxu0
        %v1734 = vadd.f32 0.0, %v1733
        %v1735 = vpop.f32.mrf.mxu0
        %v1736 = vadd.f32 0.0, %v1735
        %1737 = vdwg.mxu0
        %v1738 = vadd.f32 %v1602, %v1699
        %v1739 = vadd.f32 %v1603, %v1701
        %v1740 = vadd.f32 %v1604, %v1704
        %v1741 = vadd.f32 %v1605, %v1706
        %v1742 = vadd.f32 %v1606, %v1709
        %v1743 = vadd.f32 %v1607, %v1711
        %v1744 = vadd.f32 %v1608, %v1714
        %v1745 = vadd.f32 %v1609, %v1716
        %v1746 = vadd.f32 %v1610, %v1719
        %v1747 = vadd.f32 %v1611, %v1721
        %v1748 = vadd.f32 %v1612, %v1724
        %v1749 = vadd.f32 %v1613, %v1726
        %v1750 = vadd.f32 %v1614, %v1729
        %v1751 = vadd.f32 %v1615, %v1731
        %v1752 = vadd.f32 %v1616, %v1734
        %v1753 = vadd.f32 %v1617, %v1736
        %v1754 = vld [vmem:[#allocation2 + $0x4] sm:$0xf]
        %v1755 = vld [vmem:[#allocation2 + $0x8] sm:$0xf]
        %v1756 = vld [vmem:[#allocation2 + $0xc] sm:$0x1]
        %v1757 = vld [vmem:[#allocation2 + $0x14] sm:$0xf]
        %v1758 = vld [vmem:[#allocation2 + $0x18] sm:$0xf]
        %v1759 = vld [vmem:[#allocation2 + $0x1c] sm:$0x1]
        %v1760 = vld [vmem:[#allocation2 + $0x24] sm:$0xf]
        %v1761 = vld [vmem:[#allocation2 + $0x28] sm:$0xf]
        %v1762 = vld [vmem:[#allocation2 + $0x2c] sm:$0x1]
        %v1763 = vld [vmem:[#allocation2 + $0x34] sm:$0xf]
        %v1764 = vld [vmem:[#allocation2 + $0x38] sm:$0xf]
        %v1765 = vld [vmem:[#allocation2 + $0x3c] sm:$0x1]
        %v1766 = vld [vmem:[#allocation2 + $0x44] sm:$0xf]
        %v1767 = vld [vmem:[#allocation2 + $0x48] sm:$0xf]
        %v1768 = vld [vmem:[#allocation2 + $0x4c] sm:$0x1]
        %v1769 = vld [vmem:[#allocation2 + $0x54] sm:$0xf]
        %v1770 = vld [vmem:[#allocation2 + $0x58] sm:$0xf]
        %v1771 = vld [vmem:[#allocation2 + $0x5c] sm:$0x1]
        %v1772 = vld [vmem:[#allocation2 + $0x64] sm:$0xf]
        %v1773 = vld [vmem:[#allocation2 + $0x68] sm:$0xf]
        %v1774 = vld [vmem:[#allocation2 + $0x6c] sm:$0x1]
        %v1775 = vld [vmem:[#allocation2 + $0x74] sm:$0xf]
        %v1776 = vld [vmem:[#allocation2 + $0x78] sm:$0xf]
        %v1777 = vld [vmem:[#allocation2 + $0x7c] sm:$0x1]
        %v1778 = vld [vmem:[#allocation2 + $0x84] sm:$0xf]
        %v1779 = vld [vmem:[#allocation2 + $0x88] sm:$0xf]
        %v1780 = vld [vmem:[#allocation2 + $0x8c] sm:$0x1]
        %v1781 = vld [vmem:[#allocation2 + $0x94] sm:$0xf]
        %v1782 = vld [vmem:[#allocation2 + $0x98] sm:$0xf]
        %v1783 = vld [vmem:[#allocation2 + $0x9c] sm:$0x1]
        %vm1784 = vsmask.f32 3328
        %vm1785 = vsmask.f32 7440
        %vm1786 = vmor %vm1784, %vm1785
        %v1788 = vshrl.u32 %v1754, 16
        %v1790 = vrot.slane %v1788, 4
        %v1791 = vshll.u32 %v1754, 16
        %v1793 = vrot.slane %v1791, 5
        %v1794 = vor.u32 %v1790, %v1793
        %v1795 = vrot.slane %v1794, 4
        %v1797 = vshll.u32 %v1755, 16
        %v1799 = vrot.slane %v1797, 5
        %v1800 = vsel %vm1786, %v1795, %v1799
        %v1801 = vshrl.u32 %v1755, 16
        %v1803 = vrot.slane %v1801, 4
        %v1804 = vor.u32 %v1803, %v1799
        %v1805 = vrot.slane %v1804, 4
        %v1807 = vshll.u32 %v1756, 16
        %v1809 = vrot.slane %v1807, 5
        %v1810 = vsel %vm1786, %v1805, %v1809
        %v1812 = vshrl.u32 %v1757, 16
        %v1814 = vrot.slane %v1812, 4
        %v1815 = vshll.u32 %v1757, 16
        %v1817 = vrot.slane %v1815, 5
        %v1818 = vor.u32 %v1814, %v1817
        %v1819 = vrot.slane %v1818, 4
        %v1821 = vshll.u32 %v1758, 16
        %v1823 = vrot.slane %v1821, 5
        %v1824 = vsel %vm1786, %v1819, %v1823
        %v1825 = vshrl.u32 %v1758, 16
        %v1827 = vrot.slane %v1825, 4
        %v1828 = vor.u32 %v1827, %v1823
        %v1829 = vrot.slane %v1828, 4
        %v1831 = vshll.u32 %v1759, 16
        %v1833 = vrot.slane %v1831, 5
        %v1834 = vsel %vm1786, %v1829, %v1833
        %v1836 = vshrl.u32 %v1760, 16
        %v1838 = vrot.slane %v1836, 4
        %v1839 = vshll.u32 %v1760, 16
        %v1841 = vrot.slane %v1839, 5
        %v1842 = vor.u32 %v1838, %v1841
        %v1843 = vrot.slane %v1842, 4
        %v1845 = vshll.u32 %v1761, 16
        %v1847 = vrot.slane %v1845, 5
        %v1848 = vsel %vm1786, %v1843, %v1847
        %v1849 = vshrl.u32 %v1761, 16
        %v1851 = vrot.slane %v1849, 4
        %v1852 = vor.u32 %v1851, %v1847
        %v1853 = vrot.slane %v1852, 4
        %v1855 = vshll.u32 %v1762, 16
        %v1857 = vrot.slane %v1855, 5
        %v1858 = vsel %vm1786, %v1853, %v1857
        %v1860 = vshrl.u32 %v1763, 16
        %v1862 = vrot.slane %v1860, 4
        %v1863 = vshll.u32 %v1763, 16
        %v1865 = vrot.slane %v1863, 5
        %v1866 = vor.u32 %v1862, %v1865
        %v1867 = vrot.slane %v1866, 4
        %v1869 = vshll.u32 %v1764, 16
        %v1871 = vrot.slane %v1869, 5
        %v1872 = vsel %vm1786, %v1867, %v1871
        %v1873 = vshrl.u32 %v1764, 16
        %v1875 = vrot.slane %v1873, 4
        %v1876 = vor.u32 %v1875, %v1871
        %v1877 = vrot.slane %v1876, 4
        %v1879 = vshll.u32 %v1765, 16
        %v1881 = vrot.slane %v1879, 5
        %v1882 = vsel %vm1786, %v1877, %v1881
        %v1884 = vshrl.u32 %v1766, 16
        %v1886 = vrot.slane %v1884, 4
        %v1887 = vshll.u32 %v1766, 16
        %v1889 = vrot.slane %v1887, 5
        %v1890 = vor.u32 %v1886, %v1889
        %v1891 = vrot.slane %v1890, 4
        %v1893 = vshll.u32 %v1767, 16
        %v1895 = vrot.slane %v1893, 5
        %v1896 = vsel %vm1786, %v1891, %v1895
        %v1897 = vshrl.u32 %v1767, 16
        %v1899 = vrot.slane %v1897, 4
        %v1900 = vor.u32 %v1899, %v1895
        %v1901 = vrot.slane %v1900, 4
        %v1903 = vshll.u32 %v1768, 16
        %v1905 = vrot.slane %v1903, 5
        %v1906 = vsel %vm1786, %v1901, %v1905
        %v1908 = vshrl.u32 %v1769, 16
        %v1910 = vrot.slane %v1908, 4
        %v1911 = vshll.u32 %v1769, 16
        %v1913 = vrot.slane %v1911, 5
        %v1914 = vor.u32 %v1910, %v1913
        %v1915 = vrot.slane %v1914, 4
        %v1917 = vshll.u32 %v1770, 16
        %v1919 = vrot.slane %v1917, 5
        %v1920 = vsel %vm1786, %v1915, %v1919
        %v1921 = vshrl.u32 %v1770, 16
        %v1923 = vrot.slane %v1921, 4
        %v1924 = vor.u32 %v1923, %v1919
        %v1925 = vrot.slane %v1924, 4
        %v1927 = vshll.u32 %v1771, 16
        %v1929 = vrot.slane %v1927, 5
        %v1930 = vsel %vm1786, %v1925, %v1929
        %v1932 = vshrl.u32 %v1772, 16
        %v1934 = vrot.slane %v1932, 4
        %v1935 = vshll.u32 %v1772, 16
        %v1937 = vrot.slane %v1935, 5
        %v1938 = vor.u32 %v1934, %v1937
        %v1939 = vrot.slane %v1938, 4
        %v1941 = vshll.u32 %v1773, 16
        %v1943 = vrot.slane %v1941, 5
        %v1944 = vsel %vm1786, %v1939, %v1943
        %v1945 = vshrl.u32 %v1773, 16
        %v1947 = vrot.slane %v1945, 4
        %v1948 = vor.u32 %v1947, %v1943
        %v1949 = vrot.slane %v1948, 4
        %v1951 = vshll.u32 %v1774, 16
        %v1953 = vrot.slane %v1951, 5
        %v1954 = vsel %vm1786, %v1949, %v1953
        %v1956 = vshrl.u32 %v1775, 16
        %v1958 = vrot.slane %v1956, 4
        %v1959 = vshll.u32 %v1775, 16
        %v1961 = vrot.slane %v1959, 5
        %v1962 = vor.u32 %v1958, %v1961
        %v1963 = vrot.slane %v1962, 4
        %v1965 = vshll.u32 %v1776, 16
        %v1967 = vrot.slane %v1965, 5
        %v1968 = vsel %vm1786, %v1963, %v1967
        %v1969 = vshrl.u32 %v1776, 16
        %v1971 = vrot.slane %v1969, 4
        %v1972 = vor.u32 %v1971, %v1967
        %v1973 = vrot.slane %v1972, 4
        %v1975 = vshll.u32 %v1777, 16
        %v1977 = vrot.slane %v1975, 5
        %v1978 = vsel %vm1786, %v1973, %v1977
        %s1979 = scalar_lea.vmem [#allocation8], 128
        %v1980 = vld [vmem:[%s1979] sm:$0xf]
        %v1981 = vld [vmem:[%s1979 + $0x4] sm:$0xf]
        %v1982 = vld [vmem:[%s1979 + $0x8] sm:$0xf]
        %v1983 = vld [vmem:[%s1979 + $0xc] sm:$0xf]
        %v1984 = vld [vmem:[%s1979 + $0x10] sm:$0xf]
        %v1985 = vld [vmem:[%s1979 + $0x14] sm:$0xf]
        %v1986 = vld [vmem:[%s1979 + $0x18] sm:$0xf]
        %v1987 = vld [vmem:[%s1979 + $0x1c] sm:$0xf]
        %v1988 = vld [vmem:[%s1979 + $0x20] sm:$0xf]
        %v1989 = vld [vmem:[%s1979 + $0x24] sm:$0xf]
        %v1990 = vld [vmem:[%s1979 + $0x28] sm:$0xf]
        %v1991 = vld [vmem:[%s1979 + $0x2c] sm:$0xf]
        %v1992 = vld [vmem:[%s1979 + $0x30] sm:$0xf]
        %v1993 = vld [vmem:[%s1979 + $0x34] sm:$0xf]
        %v1994 = vld [vmem:[%s1979 + $0x38] sm:$0xf]
        %v1995 = vld [vmem:[%s1979 + $0x3c] sm:$0xf]
        %v1996 = vunpack.c.l.b16 %v1800
        %v1997 = vunpack.c.l.b16 %v1810
        %v1998 = vunpack.c.l.b16 %v1824
        %v1999 = vunpack.c.l.b16 %v1834
        %v2000 = vunpack.c.l.b16 %v1848
        %v2001 = vunpack.c.l.b16 %v1858
        %v2002 = vunpack.c.l.b16 %v1872
        %v2003 = vunpack.c.l.b16 %v1882
        %v2004 = vunpack.c.l.b16 %v1896
        %v2005 = vunpack.c.l.b16 %v1906
        %v2006 = vunpack.c.l.b16 %v1920
        %v2007 = vunpack.c.l.b16 %v1930
        %v2008 = vunpack.c.l.b16 %v1944
        %v2009 = vunpack.c.l.b16 %v1954
        %v2010 = vunpack.c.l.b16 %v1968
        %v2011 = vunpack.c.l.b16 %v1978
        %v2012 = vpack.c.b16 %v1997, %v1996
        %v2013 = vpack.c.b16 %v1999, %v1998
        %v2014 = vpack.c.b16 %v2001, %v2000
        %v2015 = vpack.c.b16 %v2003, %v2002
        %v2016 = vpack.c.b16 %v2005, %v2004
        %v2017 = vpack.c.b16 %v2007, %v2006
        %v2018 = vpack.c.b16 %v2009, %v2008
        %v2019 = vpack.c.b16 %v2011, %v2010
        %v2044 = vunpack.c.l.b16 %v1980
        %v2045 = vunpack.c.l.b16 %v1981
        %v2046 = vunpack.c.l.b16 %v1982
        %v2047 = vunpack.c.l.b16 %v1983
        %v2048 = vunpack.c.l.b16 %v1984
        %v2049 = vunpack.c.l.b16 %v1985
        %v2050 = vunpack.c.l.b16 %v1986
        %v2051 = vunpack.c.l.b16 %v1987
        %v2052 = vunpack.c.l.b16 %v1988
        %v2053 = vunpack.c.l.b16 %v1989
        %v2054 = vunpack.c.l.b16 %v1990
        %v2055 = vunpack.c.l.b16 %v1991
        %v2056 = vunpack.c.l.b16 %v1992
        %v2057 = vunpack.c.l.b16 %v1993
        %v2058 = vunpack.c.l.b16 %v1994
        %v2059 = vunpack.c.l.b16 %v1995
        %v2060 = vpack.c.b16 %v2045, %v2044
        %v2061 = vpack.c.b16 %v2047, %v2046
        %v2062 = vpack.c.b16 %v2049, %v2048
        %v2063 = vpack.c.b16 %v2051, %v2050
        %v2064 = vpack.c.b16 %v2053, %v2052
        %v2065 = vpack.c.b16 %v2055, %v2054
        %v2066 = vpack.c.b16 %v2057, %v2056
        %v2067 = vpack.c.b16 %v2059, %v2058
        %2076 = vmatpush.bf16.msra.mxu0 %v2067
        %2077 = vmatpush.bf16.msra.mxu0 %v2066
        %2078 = vmatpush.bf16.msra.mxu0 %v2065
        %2079 = vmatpush.bf16.msra.mxu0 %v2064
        %2080 = vmatpush.bf16.msra.mxu0 %v2063
        %2081 = vmatpush.bf16.msra.mxu0 %v2062
        %2082 = vmatpush.bf16.msra.mxu0 %v2061
        %2083 = vmatpush.bf16.msra.mxu0 %v2060
        %2084 = vmatmul.bf16.gmra.mxu0 %v2012
        %v2085 = vpop.f32.mrf.mxu0
        %v2086 = vadd.f32 0.0, %v2085
        %v2087 = vpop.f32.mrf.mxu0
        %v2088 = vadd.f32 0.0, %v2087
        %2089 = vmatmul.bf16.gmra.mxu0 %v2013
        %v2090 = vpop.f32.mrf.mxu0
        %v2091 = vadd.f32 0.0, %v2090
        %v2092 = vpop.f32.mrf.mxu0
        %v2093 = vadd.f32 0.0, %v2092
        %2094 = vmatmul.bf16.gmra.mxu0 %v2014
        %v2095 = vpop.f32.mrf.mxu0
        %v2096 = vadd.f32 0.0, %v2095
        %v2097 = vpop.f32.mrf.mxu0
        %v2098 = vadd.f32 0.0, %v2097
        %2099 = vmatmul.bf16.gmra.mxu0 %v2015
        %v2100 = vpop.f32.mrf.mxu0
        %v2101 = vadd.f32 0.0, %v2100
        %v2102 = vpop.f32.mrf.mxu0
        %v2103 = vadd.f32 0.0, %v2102
        %2104 = vmatmul.bf16.gmra.mxu0 %v2016
        %v2105 = vpop.f32.mrf.mxu0
        %v2106 = vadd.f32 0.0, %v2105
        %v2107 = vpop.f32.mrf.mxu0
        %v2108 = vadd.f32 0.0, %v2107
        %2109 = vmatmul.bf16.gmra.mxu0 %v2017
        %v2110 = vpop.f32.mrf.mxu0
        %v2111 = vadd.f32 0.0, %v2110
        %v2112 = vpop.f32.mrf.mxu0
        %v2113 = vadd.f32 0.0, %v2112
        %2114 = vmatmul.bf16.gmra.mxu0 %v2018
        %v2115 = vpop.f32.mrf.mxu0
        %v2116 = vadd.f32 0.0, %v2115
        %v2117 = vpop.f32.mrf.mxu0
        %v2118 = vadd.f32 0.0, %v2117
        %2119 = vmatmul.bf16.gmra.mxu0 %v2019
        %v2120 = vpop.f32.mrf.mxu0
        %v2121 = vadd.f32 0.0, %v2120
        %v2122 = vpop.f32.mrf.mxu0
        %v2123 = vadd.f32 0.0, %v2122
        %2124 = vdwg.mxu0
        %v2125 = vadd.f32 %v1738, %v2086
        %v2126 = vadd.f32 %v1739, %v2088
        %v2127 = vadd.f32 %v1740, %v2091
        %v2128 = vadd.f32 %v1741, %v2093
        %v2129 = vadd.f32 %v1742, %v2096
        %v2130 = vadd.f32 %v1743, %v2098
        %v2131 = vadd.f32 %v1744, %v2101
        %v2132 = vadd.f32 %v1745, %v2103
        %v2133 = vadd.f32 %v1746, %v2106
        %v2134 = vadd.f32 %v1747, %v2108
        %v2135 = vadd.f32 %v1748, %v2111
        %v2136 = vadd.f32 %v1749, %v2113
        %v2137 = vadd.f32 %v1750, %v2116
        %v2138 = vadd.f32 %v1751, %v2118
        %v2139 = vadd.f32 %v1752, %v2121
        %v2140 = vadd.f32 %v1753, %v2123
        %v2142 = vshrl.u32 %v1778, 16
        %v2144 = vrot.slane %v2142, 4
        %v2145 = vshll.u32 %v1778, 16
        %v2147 = vrot.slane %v2145, 5
        %v2148 = vor.u32 %v2144, %v2147
        %v2149 = vrot.slane %v2148, 4
        %v2151 = vshll.u32 %v1779, 16
        %v2153 = vrot.slane %v2151, 5
        %v2154 = vsel %vm1786, %v2149, %v2153
        %v2155 = vshrl.u32 %v1779, 16
        %v2157 = vrot.slane %v2155, 4
        %v2158 = vor.u32 %v2157, %v2153
        %v2159 = vrot.slane %v2158, 4
        %v2161 = vshll.u32 %v1780, 16
        %v2163 = vrot.slane %v2161, 5
        %v2164 = vsel %vm1786, %v2159, %v2163
        %s2165 = scalar_lea.vmem [#allocation8], 320
        %v2166 = vld [vmem:[%s2165] sm:$0xf]
        %v2167 = vld [vmem:[%s2165 + $0x4] sm:$0xf]
        %v2168 = vld [vmem:[%s2165 + $0x8] sm:$0xf]
        %v2169 = vld [vmem:[%s2165 + $0xc] sm:$0xf]
        %v2170 = vld [vmem:[%s2165 + $0x10] sm:$0xf]
        %v2171 = vld [vmem:[%s2165 + $0x14] sm:$0xf]
        %v2172 = vld [vmem:[%s2165 + $0x18] sm:$0xf]
        %v2173 = vld [vmem:[%s2165 + $0x1c] sm:$0xf]
        %v2174 = vld [vmem:[%s2165 + $0x20] sm:$0xf]
        %v2175 = vld [vmem:[%s2165 + $0x24] sm:$0xf]
        %v2176 = vld [vmem:[%s2165 + $0x28] sm:$0xf]
        %v2177 = vld [vmem:[%s2165 + $0x2c] sm:$0xf]
        %v2178 = vld [vmem:[%s2165 + $0x30] sm:$0xf]
        %v2179 = vld [vmem:[%s2165 + $0x34] sm:$0xf]
        %v2180 = vld [vmem:[%s2165 + $0x38] sm:$0xf]
        %v2181 = vld [vmem:[%s2165 + $0x3c] sm:$0xf]
        %v2182 = vunpack.c.l.b16 %v2154
        %v2183 = vunpack.c.l.b16 %v2164
        %v2184 = vpack.c.b16 %v2183, %v2182
        %v2202 = vunpack.c.l.b16 %v2166
        %v2203 = vunpack.c.l.b16 %v2167
        %v2204 = vunpack.c.l.b16 %v2168
        %v2205 = vunpack.c.l.b16 %v2169
        %v2206 = vunpack.c.l.b16 %v2170
        %v2207 = vunpack.c.l.b16 %v2171
        %v2208 = vunpack.c.l.b16 %v2172
        %v2209 = vunpack.c.l.b16 %v2173
        %v2210 = vunpack.c.l.b16 %v2174
        %v2211 = vunpack.c.l.b16 %v2175
        %v2212 = vunpack.c.l.b16 %v2176
        %v2213 = vunpack.c.l.b16 %v2177
        %v2214 = vunpack.c.l.b16 %v2178
        %v2215 = vunpack.c.l.b16 %v2179
        %v2216 = vunpack.c.l.b16 %v2180
        %v2217 = vunpack.c.l.b16 %v2181
        %v2218 = vpack.c.b16 %v2203, %v2202
        %v2219 = vpack.c.b16 %v2205, %v2204
        %v2220 = vpack.c.b16 %v2207, %v2206
        %v2221 = vpack.c.b16 %v2209, %v2208
        %v2222 = vpack.c.b16 %v2211, %v2210
        %v2223 = vpack.c.b16 %v2213, %v2212
        %v2224 = vpack.c.b16 %v2215, %v2214
        %v2225 = vpack.c.b16 %v2217, %v2216
        %2234 = vmatpush.bf16.msra.mxu0 %v2225
        %2235 = vmatpush.bf16.msra.mxu0 %v2224
        %2236 = vmatpush.bf16.msra.mxu0 %v2223
        %2237 = vmatpush.bf16.msra.mxu0 %v2222
        %2238 = vmatpush.bf16.msra.mxu0 %v2221
        %2239 = vmatpush.bf16.msra.mxu0 %v2220
        %2240 = vmatpush.bf16.msra.mxu0 %v2219
        %2241 = vmatpush.bf16.msra.mxu0 %v2218
        %2242 = vmatmul.bf16.gmra.mxu0 %v2013
        %v2243 = vpop.f32.mrf.mxu0
        %v2244 = vadd.f32 0.0, %v2243
        %v2245 = vpop.f32.mrf.mxu0
        %v2246 = vadd.f32 0.0, %v2245
        %2247 = vmatmul.bf16.gmra.mxu0 %v2014
        %v2248 = vpop.f32.mrf.mxu0
        %v2249 = vadd.f32 0.0, %v2248
        %v2250 = vpop.f32.mrf.mxu0
        %v2251 = vadd.f32 0.0, %v2250
        %2252 = vmatmul.bf16.gmra.mxu0 %v2015
        %v2253 = vpop.f32.mrf.mxu0
        %v2254 = vadd.f32 0.0, %v2253
        %v2255 = vpop.f32.mrf.mxu0
        %v2256 = vadd.f32 0.0, %v2255
        %2257 = vmatmul.bf16.gmra.mxu0 %v2016
        %v2258 = vpop.f32.mrf.mxu0
        %v2259 = vadd.f32 0.0, %v2258
        %v2260 = vpop.f32.mrf.mxu0
        %v2261 = vadd.f32 0.0, %v2260
        %2262 = vmatmul.bf16.gmra.mxu0 %v2017
        %v2263 = vpop.f32.mrf.mxu0
        %v2264 = vadd.f32 0.0, %v2263
        %v2265 = vpop.f32.mrf.mxu0
        %v2266 = vadd.f32 0.0, %v2265
        %2267 = vmatmul.bf16.gmra.mxu0 %v2018
        %v2268 = vpop.f32.mrf.mxu0
        %v2269 = vadd.f32 0.0, %v2268
        %v2270 = vpop.f32.mrf.mxu0
        %v2271 = vadd.f32 0.0, %v2270
        %2272 = vmatmul.bf16.gmra.mxu0 %v2019
        %v2273 = vpop.f32.mrf.mxu0
        %v2274 = vadd.f32 0.0, %v2273
        %v2275 = vpop.f32.mrf.mxu0
        %v2276 = vadd.f32 0.0, %v2275
        %2277 = vmatmul.bf16.gmra.mxu0 %v2184
        %v2278 = vpop.f32.mrf.mxu0
        %v2279 = vadd.f32 0.0, %v2278
        %v2280 = vpop.f32.mrf.mxu0
        %v2281 = vadd.f32 0.0, %v2280
        %2282 = vdwg.mxu0
        %v2283 = vadd.f32 %v2125, %v2244
        %v2284 = vadd.f32 %v2126, %v2246
        %v2285 = vadd.f32 %v2127, %v2249
        %v2286 = vadd.f32 %v2128, %v2251
        %v2287 = vadd.f32 %v2129, %v2254
        %v2288 = vadd.f32 %v2130, %v2256
        %v2289 = vadd.f32 %v2131, %v2259
        %v2290 = vadd.f32 %v2132, %v2261
        %v2291 = vadd.f32 %v2133, %v2264
        %v2292 = vadd.f32 %v2134, %v2266
        %v2293 = vadd.f32 %v2135, %v2269
        %v2294 = vadd.f32 %v2136, %v2271
        %v2295 = vadd.f32 %v2137, %v2274
        %v2296 = vadd.f32 %v2138, %v2276
        %v2297 = vadd.f32 %v2139, %v2279
        %v2298 = vadd.f32 %v2140, %v2281
        %v2300 = vshrl.u32 %v1781, 16
        %v2302 = vrot.slane %v2300, 4
        %v2303 = vshll.u32 %v1781, 16
        %v2305 = vrot.slane %v2303, 5
        %v2306 = vor.u32 %v2302, %v2305
        %v2307 = vrot.slane %v2306, 4
        %v2309 = vshll.u32 %v1782, 16
        %v2311 = vrot.slane %v2309, 5
        %v2312 = vsel %vm1786, %v2307, %v2311
        %v2313 = vshrl.u32 %v1782, 16
        %v2315 = vrot.slane %v2313, 4
        %v2316 = vor.u32 %v2315, %v2311
        %v2317 = vrot.slane %v2316, 4
        %v2319 = vshll.u32 %v1783, 16
        %v2321 = vrot.slane %v2319, 5
        %v2322 = vsel %vm1786, %v2317, %v2321
        %s2323 = scalar_lea.vmem [#allocation8], 512
        %v2324 = vld [vmem:[%s2323] sm:$0xf]
        %v2325 = vld [vmem:[%s2323 + $0x4] sm:$0xf]
        %v2326 = vld [vmem:[%s2323 + $0x8] sm:$0xf]
        %v2327 = vld [vmem:[%s2323 + $0xc] sm:$0xf]
        %v2328 = vld [vmem:[%s2323 + $0x10] sm:$0xf]
        %v2329 = vld [vmem:[%s2323 + $0x14] sm:$0xf]
        %v2330 = vld [vmem:[%s2323 + $0x18] sm:$0xf]
        %v2331 = vld [vmem:[%s2323 + $0x1c] sm:$0xf]
        %v2332 = vld [vmem:[%s2323 + $0x20] sm:$0xf]
        %v2333 = vld [vmem:[%s2323 + $0x24] sm:$0xf]
        %v2334 = vld [vmem:[%s2323 + $0x28] sm:$0xf]
        %v2335 = vld [vmem:[%s2323 + $0x2c] sm:$0xf]
        %v2336 = vld [vmem:[%s2323 + $0x30] sm:$0xf]
        %v2337 = vld [vmem:[%s2323 + $0x34] sm:$0xf]
        %v2338 = vld [vmem:[%s2323 + $0x38] sm:$0xf]
        %v2339 = vld [vmem:[%s2323 + $0x3c] sm:$0xf]
        %v2340 = vunpack.c.l.b16 %v2312
        %v2341 = vunpack.c.l.b16 %v2322
        %v2342 = vpack.c.b16 %v2341, %v2340
        %v2360 = vunpack.c.l.b16 %v2324
        %v2361 = vunpack.c.l.b16 %v2325
        %v2362 = vunpack.c.l.b16 %v2326
        %v2363 = vunpack.c.l.b16 %v2327
        %v2364 = vunpack.c.l.b16 %v2328
        %v2365 = vunpack.c.l.b16 %v2329
        %v2366 = vunpack.c.l.b16 %v2330
        %v2367 = vunpack.c.l.b16 %v2331
        %v2368 = vunpack.c.l.b16 %v2332
        %v2369 = vunpack.c.l.b16 %v2333
        %v2370 = vunpack.c.l.b16 %v2334
        %v2371 = vunpack.c.l.b16 %v2335
        %v2372 = vunpack.c.l.b16 %v2336
        %v2373 = vunpack.c.l.b16 %v2337
        %v2374 = vunpack.c.l.b16 %v2338
        %v2375 = vunpack.c.l.b16 %v2339
        %v2376 = vpack.c.b16 %v2361, %v2360
        %v2377 = vpack.c.b16 %v2363, %v2362
        %v2378 = vpack.c.b16 %v2365, %v2364
        %v2379 = vpack.c.b16 %v2367, %v2366
        %v2380 = vpack.c.b16 %v2369, %v2368
        %v2381 = vpack.c.b16 %v2371, %v2370
        %v2382 = vpack.c.b16 %v2373, %v2372
        %v2383 = vpack.c.b16 %v2375, %v2374
        %2392 = vmatpush.bf16.msra.mxu0 %v2383
        %2393 = vmatpush.bf16.msra.mxu0 %v2382
        %2394 = vmatpush.bf16.msra.mxu0 %v2381
        %2395 = vmatpush.bf16.msra.mxu0 %v2380
        %2396 = vmatpush.bf16.msra.mxu0 %v2379
        %2397 = vmatpush.bf16.msra.mxu0 %v2378
        %2398 = vmatpush.bf16.msra.mxu0 %v2377
        %2399 = vmatpush.bf16.msra.mxu0 %v2376
        %2400 = vmatmul.bf16.gmra.mxu0 %v2014
        %v2401 = vpop.f32.mrf.mxu0
        %v2402 = vadd.f32 0.0, %v2401
        %v2403 = vpop.f32.mrf.mxu0
        %v2404 = vadd.f32 0.0, %v2403
        %2405 = vmatmul.bf16.gmra.mxu0 %v2015
        %v2406 = vpop.f32.mrf.mxu0
        %v2407 = vadd.f32 0.0, %v2406
        %v2408 = vpop.f32.mrf.mxu0
        %v2409 = vadd.f32 0.0, %v2408
        %2410 = vmatmul.bf16.gmra.mxu0 %v2016
        %v2411 = vpop.f32.mrf.mxu0
        %v2412 = vadd.f32 0.0, %v2411
        %v2413 = vpop.f32.mrf.mxu0
        %v2414 = vadd.f32 0.0, %v2413
        %2415 = vmatmul.bf16.gmra.mxu0 %v2017
        %v2416 = vpop.f32.mrf.mxu0
        %v2417 = vadd.f32 0.0, %v2416
        %v2418 = vpop.f32.mrf.mxu0
        %v2419 = vadd.f32 0.0, %v2418
        %2420 = vmatmul.bf16.gmra.mxu0 %v2018
        %v2421 = vpop.f32.mrf.mxu0
        %v2422 = vadd.f32 0.0, %v2421
        %v2423 = vpop.f32.mrf.mxu0
        %v2424 = vadd.f32 0.0, %v2423
        %2425 = vmatmul.bf16.gmra.mxu0 %v2019
        %v2426 = vpop.f32.mrf.mxu0
        %v2427 = vadd.f32 0.0, %v2426
        %v2428 = vpop.f32.mrf.mxu0
        %v2429 = vadd.f32 0.0, %v2428
        %2430 = vmatmul.bf16.gmra.mxu0 %v2184
        %v2431 = vpop.f32.mrf.mxu0
        %v2432 = vadd.f32 0.0, %v2431
        %v2433 = vpop.f32.mrf.mxu0
        %v2434 = vadd.f32 0.0, %v2433
        %2435 = vmatmul.bf16.gmra.mxu0 %v2342
        %v2436 = vpop.f32.mrf.mxu0
        %v2437 = vadd.f32 0.0, %v2436
        %v2438 = vpop.f32.mrf.mxu0
        %v2439 = vadd.f32 0.0, %v2438
        %2440 = vdwg.mxu0
        %v2441 = vadd.f32 %v2283, %v2402
        %v2442 = vadd.f32 %v2284, %v2404
        %v2443 = vadd.f32 %v2285, %v2407
        %v2444 = vadd.f32 %v2286, %v2409
        %v2445 = vadd.f32 %v2287, %v2412
        %v2446 = vadd.f32 %v2288, %v2414
        %v2447 = vadd.f32 %v2289, %v2417
        %v2448 = vadd.f32 %v2290, %v2419
        %v2449 = vadd.f32 %v2291, %v2422
        %v2450 = vadd.f32 %v2292, %v2424
        %v2451 = vadd.f32 %v2293, %v2427
        %v2452 = vadd.f32 %v2294, %v2429
        %v2453 = vadd.f32 %v2295, %v2432
        %v2454 = vadd.f32 %v2296, %v2434
        %v2455 = vadd.f32 %v2297, %v2437
        %v2456 = vadd.f32 %v2298, %v2439
        %v2457 = vld [vmem:[%s4] sm:$0x1]
        %v2459 = vperm.slane %v2457, 0
        %v2461 = vadd.f32 %v2441, %v2459
        %v2462 = vadd.f32 %v2442, %v2459
        %v2463 = vadd.f32 %v2443, %v2459
        %v2464 = vadd.f32 %v2444, %v2459
        %v2465 = vadd.f32 %v2445, %v2459
        %v2466 = vadd.f32 %v2446, %v2459
        %v2467 = vadd.f32 %v2447, %v2459
        %v2468 = vadd.f32 %v2448, %v2459
        %v2469 = vadd.f32 %v2449, %v2459
        %v2470 = vadd.f32 %v2450, %v2459
        %v2471 = vadd.f32 %v2451, %v2459
        %v2472 = vadd.f32 %v2452, %v2459
        %v2473 = vadd.f32 %v2453, %v2459
        %v2474 = vadd.f32 %v2454, %v2459
        %v2475 = vadd.f32 %v2455, %v2459
        %v2476 = vadd.f32 %v2456, %v2459
        %v2477 = vmax.f32 %v2461, 0.0
        %v2478 = vmax.f32 %v2462, 0.0
        %v2479 = vmax.f32 %v2463, 0.0
        %v2480 = vmax.f32 %v2464, 0.0
        %v2481 = vmax.f32 %v2465, 0.0
        %v2482 = vmax.f32 %v2466, 0.0
        %v2483 = vmax.f32 %v2467, 0.0
        %v2484 = vmax.f32 %v2468, 0.0
        %v2485 = vmax.f32 %v2469, 0.0
        %v2486 = vmax.f32 %v2470, 0.0
        %v2487 = vmax.f32 %v2471, 0.0
        %v2488 = vmax.f32 %v2472, 0.0
        %v2489 = vmax.f32 %v2473, 0.0
        %v2490 = vmax.f32 %v2474, 0.0
        %v2491 = vmax.f32 %v2475, 0.0
        %v2492 = vmax.f32 %v2476, 0.0
        %v2493 = vpack.c.bf16 %v2478, %v2477
        %v2494 = vpack.c.bf16 %v2480, %v2479
        %v2495 = vpack.c.bf16 %v2482, %v2481
        %v2496 = vpack.c.bf16 %v2484, %v2483
        %v2497 = vpack.c.bf16 %v2486, %v2485
        %v2498 = vpack.c.bf16 %v2488, %v2487
        %v2499 = vpack.c.bf16 %v2490, %v2489
        %v2500 = vpack.c.bf16 %v2492, %v2491
        %v2501 = vld [vmem:[#allocation9] sm:$0xf]
        %v2502 = vld [vmem:[#allocation9 + $0x4] sm:$0xf]
        %v2503 = vld [vmem:[#allocation9 + $0x8] sm:$0xf]
        %v2504 = vld [vmem:[#allocation9 + $0xc] sm:$0xf]
        %v2505 = vld [vmem:[#allocation9 + $0x10] sm:$0xf]
        %v2506 = vld [vmem:[#allocation9 + $0x14] sm:$0xf]
        %v2507 = vld [vmem:[#allocation9 + $0x18] sm:$0xf]
        %v2508 = vld [vmem:[#allocation9 + $0x1c] sm:$0xf]
        %v2509 = vld [vmem:[#allocation9 + $0x20] sm:$0xf]
        %v2510 = vld [vmem:[#allocation9 + $0x24] sm:$0xf]
        %v2511 = vld [vmem:[#allocation9 + $0x28] sm:$0xf]
        %v2512 = vld [vmem:[#allocation9 + $0x2c] sm:$0xf]
        %v2513 = vld [vmem:[#allocation9 + $0x30] sm:$0xf]
        %v2514 = vld [vmem:[#allocation9 + $0x34] sm:$0xf]
        %v2515 = vld [vmem:[#allocation9 + $0x38] sm:$0xf]
        %v2516 = vld [vmem:[#allocation9 + $0x3c] sm:$0xf]
        %v2517 = vld [vmem:[%s6] sm:$0x1]
        %v2519 = vperm.slane %v2517, 0
        %v2537 = vunpack.c.l.b16 %v2501
        %v2538 = vunpack.c.l.b16 %v2502
        %v2539 = vunpack.c.l.b16 %v2503
        %v2540 = vunpack.c.l.b16 %v2504
        %v2541 = vunpack.c.l.b16 %v2505
        %v2542 = vunpack.c.l.b16 %v2506
        %v2543 = vunpack.c.l.b16 %v2507
        %v2544 = vunpack.c.l.b16 %v2508
        %v2545 = vunpack.c.l.b16 %v2509
        %v2546 = vunpack.c.l.b16 %v2510
        %v2547 = vunpack.c.l.b16 %v2511
        %v2548 = vunpack.c.l.b16 %v2512
        %v2549 = vunpack.c.l.b16 %v2513
        %v2550 = vunpack.c.l.b16 %v2514
        %v2551 = vunpack.c.l.b16 %v2515
        %v2552 = vunpack.c.l.b16 %v2516
        %v2553 = vpack.c.b16 %v2538, %v2537
        %v2554 = vpack.c.b16 %v2540, %v2539
        %v2555 = vpack.c.b16 %v2542, %v2541
        %v2556 = vpack.c.b16 %v2544, %v2543
        %v2557 = vpack.c.b16 %v2546, %v2545
        %v2558 = vpack.c.b16 %v2548, %v2547
        %v2559 = vpack.c.b16 %v2550, %v2549
        %v2560 = vpack.c.b16 %v2552, %v2551
        %2569 = vmatpush.bf16.msra.mxu0 %v2560
        %2570 = vmatpush.bf16.msra.mxu0 %v2559
        %2571 = vmatpush.bf16.msra.mxu0 %v2558
        %2572 = vmatpush.bf16.msra.mxu0 %v2557
        %2573 = vmatpush.bf16.msra.mxu0 %v2556
        %2574 = vmatpush.bf16.msra.mxu0 %v2555
        %2575 = vmatpush.bf16.msra.mxu0 %v2554
        %2576 = vmatpush.bf16.msra.mxu0 %v2553
        %2577 = vmatmul.bf16.gmra.mxu0 %v2493
        %v2578 = vpop.f32.mrf.mxu0
        %v2579 = vadd.f32 %v2519, %v2578
        %v2580 = vpop.f32.mrf.mxu0
        %v2581 = vadd.f32 %v2519, %v2580
        %2582 = vmatmul.bf16.gmra.mxu0 %v2494
        %v2583 = vpop.f32.mrf.mxu0
        %v2584 = vadd.f32 %v2519, %v2583
        %v2585 = vpop.f32.mrf.mxu0
        %v2586 = vadd.f32 %v2519, %v2585
        %2587 = vmatmul.bf16.gmra.mxu0 %v2495
        %v2588 = vpop.f32.mrf.mxu0
        %v2589 = vadd.f32 %v2519, %v2588
        %v2590 = vpop.f32.mrf.mxu0
        %v2591 = vadd.f32 %v2519, %v2590
        %2592 = vmatmul.bf16.gmra.mxu0 %v2496
        %v2593 = vpop.f32.mrf.mxu0
        %v2594 = vadd.f32 %v2519, %v2593
        %v2595 = vpop.f32.mrf.mxu0
        %v2596 = vadd.f32 %v2519, %v2595
        %2597 = vmatmul.bf16.gmra.mxu0 %v2497
        %v2598 = vpop.f32.mrf.mxu0
        %v2599 = vadd.f32 %v2519, %v2598
        %v2600 = vpop.f32.mrf.mxu0
        %v2601 = vadd.f32 %v2519, %v2600
        %2602 = vmatmul.bf16.gmra.mxu0 %v2498
        %v2603 = vpop.f32.mrf.mxu0
        %v2604 = vadd.f32 %v2519, %v2603
        %v2605 = vpop.f32.mrf.mxu0
        %v2606 = vadd.f32 %v2519, %v2605
        %2607 = vmatmul.bf16.gmra.mxu0 %v2499
        %v2608 = vpop.f32.mrf.mxu0
        %v2609 = vadd.f32 %v2519, %v2608
        %v2610 = vpop.f32.mrf.mxu0
        %v2611 = vadd.f32 %v2519, %v2610
        %2612 = vmatmul.bf16.gmra.mxu0 %v2500
        %v2613 = vpop.f32.mrf.mxu0
        %v2614 = vadd.f32 %v2519, %v2613
        %v2615 = vpop.f32.mrf.mxu0
        %v2616 = vadd.f32 %v2519, %v2615
        %2617 = vdwg.mxu0
        %2618 = vst [vmem:[%s362] sm:$0xff] %v2579
        %2619 = vst [vmem:[%s362 + $0x8] sm:$0xff] %v2581
        %2620 = vst [vmem:[%s362 + $0x10] sm:$0xff] %v2584
        %2621 = vst [vmem:[%s362 + $0x18] sm:$0xff] %v2586
        %2622 = vst [vmem:[%s362 + $0x20] sm:$0xff] %v2589
        %2623 = vst [vmem:[%s362 + $0x28] sm:$0xff] %v2591
        %2624 = vst [vmem:[%s362 + $0x30] sm:$0xff] %v2594
        %2625 = vst [vmem:[%s362 + $0x38] sm:$0xff] %v2596
        %2626 = vst [vmem:[%s362 + $0x40] sm:$0xff] %v2599
        %2627 = vst [vmem:[%s362 + $0x48] sm:$0xff] %v2601
        %2628 = vst [vmem:[%s362 + $0x50] sm:$0xff] %v2604
        %2629 = vst [vmem:[%s362 + $0x58] sm:$0xff] %v2606
        %2630 = vst [vmem:[%s362 + $0x60] sm:$0xff] %v2609
        %2631 = vst [vmem:[%s362 + $0x68] sm:$0xff] %v2611
        %2632 = vst [vmem:[%s362 + $0x70] sm:$0xff] %v2614
        %2633 = vst [vmem:[%s362 + $0x78] sm:$0xff] %v2616
        %s2634 = sand.u32 %s200, 1
        %s2635 = scalar_lea.sflag [#allocation5], %s2634
        %s2636 = sand.u32 %s200, 1
        %s2637 = smul.addr %s2636, 128
        %s2638 = scalar_lea.vmem [#allocation11], %s2637
        // Predicated region
        $region73: #{tpu_custom_call.1} parent=47 // pred_check
          %p2639 = pneg %p210
        $region74: #{tpu_custom_call.1} parent=47 // pred_check_branch
          %2641 = sbr.rel (%p2639) target = $region76
        $region75: #{tpu_custom_call.1} parent=47 // pred_region
          %s2642 = smul.u32 8, %s31
          %2644 = vsyncadd %s2635, 0
          %s2645 = smul.addr %s2642, 2
          %s2646 = smul.addr %s30, 32
          %s2647 = sadd.s32 %s2645, %s2646
          %s2648 = smul.addr %s2647, 8
          %s2649 = scalar_lea.hbm %s7, %s2648
          %s2650 = sshll.u32 %s2638, 4
          %s2651 = int_to_ptr.vmem [resolvable:$true] %s2650
          %s2652 = sshll.u32 %s2649, 4
          %s2653 = int_to_ptr.hbm [resolvable:$true] %s2652
          %2658 = dma.vmem_to_hbm [thread:$0]  %s2651, 2048, %s2653, %s2635, 128, 128, 8
        $region76: #{tpu_custom_call.1} parent=47 // pred_fallthru
          _
      $region48: #{tpu_custom_call.1} parent=5 // pred_fallthru
        _
      %p2659 = scmp.le.s32.totalorder 2, %s21
      // Predicated region
      $region77: #{tpu_custom_call.1} parent=5 // pred_check
        %p2660 = pneg %p2659
      $region78: #{tpu_custom_call.1} parent=5 // pred_check_branch
        %2662 = sbr.rel (%p2660) target = $region80
      $region79: #{tpu_custom_call.1} parent=5 // pred_region
        %s2663 = ssub.s32 %s21, 2
        // Predicated region
        $region81: #{tpu_custom_call.1} parent=79 // pred_check
          %p2664 = pneg %p216
        $region82: #{tpu_custom_call.1} parent=79 // pred_check_branch
          %2666 = sbr.rel (%p2664) target = $region84
        $region83: #{tpu_custom_call.1} parent=79 // pred_region
          %s2667 = sand.u32 %s201, 1
          %s2668 = scalar_lea.sflag [#allocation5], %s2667
          %s2669 = sand.u32 %s201, 1
          %s2670 = smul.addr %s2669, 128
          %s2671 = scalar_lea.vmem [#allocation11], %s2670
          %2673 = dma.done %s2668, 2048
        $region84: #{tpu_custom_call.1} parent=79 // pred_fallthru
          _
      $region80: #{tpu_custom_call.1} parent=5 // pred_fallthru
        _
    $region6: #{tpu_custom_call.1} parent=1 // loop_footer
      %s25 = sadd.s32 1, %s21
    $region7: #{tpu_custom_call.1} parent=1 // loop_footer_branch
      %20 = sbr.rel target = $region3
    $region8: #{tpu_custom_call.1} parent=1 // loop_exit
      _
    %2674 = vsyncpa [#allocation4], 1
    %s2675 = scalar_lea.sflag [#allocation4], 1
    %2676 = vsyncpa %s2675, 1
    %2677 = vsyncpa [#allocation7], 1
    %2678 = vsyncpa [#allocation10], 1
    %2679 = vsyncpa [#allocation5], 1
    %s2680 = scalar_lea.sflag [#allocation5], 1
    %2681 = vsyncpa %s2680, 1

</llo_original>
